<compile_context>
chip_gen: v5e
topology: v5e:2x2
jax: 0.10.0
libtpu: 0.0.40
codegen_flags: <defaults>
</compile_context>

<pallas_src>
import functools
from types import SimpleNamespace

import jax
import jax.numpy as jnp
from jax.experimental import pallas as pl
from jax.experimental.pallas import tpu as pltpu


# ---------------- config (synthetic, small) ----------------
cfg = SimpleNamespace(
    backbone_pose="resnet_18",
    hand_branch=True,
    num_joints=21,
    depth_dim=8,            # D of the volume heatmap
    hm_size=8,              # H == W of the heatmap
    img_size=64,            # nominal input-image size in pixels
    depth_range=0.4,        # metric depth range of the volume (meters)
    dim_backbone_feat=32,   # small synthetic stand-in for 512 / 2048
    neck_feat=32,
)

PAD_JOINTS = 32             # joints lane-padded 21 -> 32, so D*32 = 256 lanes


# ---------------- fused Pallas kernel ----------------
def _fused_pose_kernel(x_ref, w1_ref, b1_ref, w2_ref, b2_ref, w3_ref, b3_ref,
                       r_ref, sel_ref, cam_ref, o_ref, *,
                       bsz, hw, depth, jp, px_scale, z_scale, z_half_range):
    # ---- backbone -> neck -> head GEMM chain, M = bsz*hw rows on the MXU ----
    # (backbone/neck/volume_head are 1x1-conv stand-ins == per-pixel GEMMs)
    h = jnp.dot(x_ref[...], w1_ref[...],
                preferred_element_type=jnp.float32) + b1_ref[...]
    h = jnp.maximum(h, 0.0).astype(jnp.bfloat16)
    h = jnp.dot(h, w2_ref[...],
                preferred_element_type=jnp.float32) + b2_ref[...]
    h = jnp.maximum(h, 0.0).astype(jnp.bfloat16)
    z = jnp.dot(h, w3_ref[...],
                preferred_element_type=jnp.float32) + b3_ref[...]
    # z: (bsz*hw, depth*jp); column c = d*jp + j (depth-major, lane-padded j)

    R = r_ref[...]            # (8, hw)  rows = [1, x-coord, y-coord, 0...]
    sel = sel_ref[...]        # (depth*jp, 2*jp)  [depth-sum | d-weighted-sum]
    cam = cam_ref[0]          # (bsz, 8) = [1/fx, 1/fy, cx, cy, center_z, 0,0,0]

    rows = []
    for b in range(bsz):      # static unroll, bsz == 2
        zb = z[b * hw:(b + 1) * hw, :]                         # (hw, depth*jp)

        # per-sample, per-joint max: exact softmax shift, denom >= 1,
        # and conf == 1 / denom exactly.
        cm = jnp.max(zb, axis=0, keepdims=True)                # (1, depth*jp)
        pj = cm[:, 0:jp]
        for d in range(1, depth):
            pj = jnp.maximum(pj, cm[:, d * jp:(d + 1) * jp])   # (1, jp)
        mrow = jnp.concatenate([pj] * depth, axis=1)           # (1, depth*jp)
        eb = jnp.exp(zb - mrow)                                # (hw, depth*jp)

        # spatial reduction + depth/joint selection: two small MXU matmuls
        A = jnp.dot(R, eb, preferred_element_type=jnp.float32)     # (8, depth*jp)
        G = jnp.dot(A, sel, preferred_element_type=jnp.float32)    # (8, 2*jp)
        s = G[0:1, 0:jp]           # softmax denominator per joint
        xn = G[1:2, 0:jp]          # E[x] numerator
        yn = G[2:3, 0:jp]          # E[y] numerator
        zn = G[0:1, jp:2 * jp]     # E[z] numerator

        inv = pl.reciprocal(s, approx=False)     # exact; feeds metric coords
        ex = xn * inv
        ey = yn * inv
        ez = zn * inv
        conf = inv                                # max of softmaxed heatmap

        # ---- fused decode_volume (camera-space joints) ----
        ifx = cam[b:b + 1, 0:1]
        ify = cam[b:b + 1, 1:2]
        cx = cam[b:b + 1, 2:3]
        cy = cam[b:b + 1, 3:4]
        cz = cam[b:b + 1, 4:5]
        zc = (ez * z_scale - 1.0) * z_half_range + cz          # metric depth
        X = (ex * px_scale - cx) * ifx * zc
        Y = (ey * px_scale - cy) * ify * zc
        rows.append(jnp.concatenate([X, Y, zc, conf], axis=1))  # (1, 4*jp)

    o_ref[0] = jnp.concatenate(rows, axis=0)                    # (bsz, 128)


def pose_fused_forward(cfg, params, x, cam, S, B, HW, C):
    """x: (S*HW, C) bf16, cam: (S//B, B, 8) -> (S//B, B, 128) packed rows."""
    JP = PAD_JOINTS
    D = cfg.depth_dim
    F1 = params["backbone_w"].shape[1]
    F2 = params["neck_w"].shape[1]
    CP = D * JP
    G = S // B
    kernel = functools.partial(
        _fused_pose_kernel, bsz=B, hw=HW, depth=D, jp=JP,
        px_scale=float(cfg.img_size) / float(cfg.hm_size),
        z_scale=2.0 / float(D),
        z_half_range=float(cfg.depth_range) * 0.5)
    return pl.pallas_call(
        kernel,
        out_shape=jax.ShapeDtypeStruct((G, B, 4 * JP), jnp.float32),
        grid_spec=pltpu.PrefetchScalarGridSpec(
            num_scalar_prefetch=0,
            grid=(G,),
            in_specs=[
                pl.BlockSpec((B * HW, C), lambda g: (g, 0)),
                pl.BlockSpec((C, F1), lambda g: (0, 0)),
                pl.BlockSpec((1, F1), lambda g: (0, 0)),
                pl.BlockSpec((F1, F2), lambda g: (0, 0)),
                pl.BlockSpec((1, F2), lambda g: (0, 0)),
                pl.BlockSpec((F2, CP), lambda g: (0, 0)),
                pl.BlockSpec((1, CP), lambda g: (0, 0)),
                pl.BlockSpec((8, HW), lambda g: (0, 0)),
                pl.BlockSpec((CP, 2 * JP), lambda g: (0, 0)),
                pl.BlockSpec((1, B, 8), lambda g: (g, 0, 0)),
            ],
            out_specs=pl.BlockSpec((1, B, 4 * JP), lambda g: (g, 0, 0)),
        ),
        compiler_params=pltpu.CompilerParams(
            dimension_semantics=("parallel",)),
    )(x, params["backbone_w"], params["backbone_b"],
      params["neck_w"], params["neck_b"],
      params["head_w_pad"], params["head_b_pad"],
      params["R"], params["Ssel"], cam)


# ---------------- host-side parameter / constant setup ----------------
def _pad_head(w, b, J, D, JP):
    """(Cin, J*D) col = j*D+d  ->  depth-major lane-padded (Cin, D*JP)."""
    Cin = w.shape[0]
    w_dj = jnp.transpose(w.reshape(Cin, J, D), (0, 2, 1))         # (Cin, D, J)
    w_pad = jnp.zeros((Cin, D, JP), w.dtype).at[:, :, :J].set(w_dj)
    b_dj = jnp.transpose(b.reshape(1, J, D), (0, 2, 1))           # (1, D, J)
    b_pad = jnp.zeros((1, D, JP), b.dtype).at[:, :, :J].set(b_dj)
    return w_pad.reshape(Cin, D * JP), b_pad.reshape(1, D * JP)


def init_params(key, cfg, c_in):
    ks = jax.random.split(key, 3)

    def w(k, cin, cout):
        return jax.random.normal(k, (cin, cout), jnp.float32) / jnp.sqrt(
            jnp.float32(cin))

    head_w = w(ks[2], cfg.neck_feat, cfg.num_joints * cfg.depth_dim)
    head_b = jnp.zeros((1, cfg.num_joints * cfg.depth_dim), jnp.float32)
    head_w_pad, head_b_pad = _pad_head(head_w, head_b, cfg.num_joints,
                                       cfg.depth_dim, PAD_JOINTS)

    # R: (8, HW) rows = [ones, x-coord (p % W), y-coord (p // W), 0, ...]
    W_ = cfg.hm_size
    HW = cfg.hm_size * cfg.hm_size
    p = jnp.arange(HW)
    R = (jnp.zeros((8, HW), jnp.float32)
         .at[0].set(1.0)
         .at[1].set((p % W_).astype(jnp.float32))
         .at[2].set((p // W_).astype(jnp.float32)))

    # Ssel: (D*JP, 2*JP).  col j sums over depth, col JP+j is d-weighted sum.
    D, JP = cfg.depth_dim, PAD_JOINTS
    rows = jnp.arange(D * JP)
    jj = rows % JP
    dd = rows // JP
    Ssel = (jnp.zeros((D * JP, 2 * JP), jnp.float32)
            .at[rows, jj].set(1.0)
            .at[rows, JP + jj].set(dd.astype(jnp.float32)))

    return {
        "backbone_w": w(ks[0], c_in, cfg.dim_backbone_feat).astype(jnp.bfloat16),
        "backbone_b": jnp.zeros((1, cfg.dim_backbone_feat), jnp.float32),
        "neck_w": w(ks[1], cfg.dim_backbone_feat, cfg.neck_feat).astype(jnp.bfloat16),
        "neck_b": jnp.zeros((1, cfg.neck_feat), jnp.float32),
        "head_w_pad": head_w_pad.astype(jnp.bfloat16),
        "head_b_pad": head_b_pad,
        "R": R,
        "Ssel": Ssel,
    }


# ---------------- forward (wrapper is reshape/slice only) ----------------
def pose_model_forward(cfg, params, inputs, metas):
    img = inputs["img"]                          # (T, N, C, H, W) NCHW frames
    T, N, C, H, W = img.shape
    S, HW, J = T * N, H * W, cfg.num_joints

    # samples per block so the GEMM chain runs with M = B*HW >= 128
    B = max(1, min(S, 128 // HW)) if HW <= 128 else 1
    while S % B:
        B -= 1

    # NCHW -> row-major (sample, h, w) x channel rows; bf16 MXU operands.
    x = jnp.transpose(img, (0, 1, 3, 4, 2)).reshape(S * HW, C).astype(jnp.bfloat16)

    # per-sample camera / center scalars for the fused decode_volume epilogue
    cam_intr = metas["cam_intr"].reshape(S, 3, 3).astype(jnp.float32)
    center = metas["hand_center_3d"].reshape(S, 3).astype(jnp.float32)
    zeros = jnp.zeros((S,), jnp.float32)
    cam = jnp.stack([1.0 / cam_intr[:, 0, 0], 1.0 / cam_intr[:, 1, 1],
                     cam_intr[:, 0, 2], cam_intr[:, 1, 2], center[:, 2],
                     zeros, zeros, zeros], axis=1).reshape(S // B, B, 8)

    raw = pose_fused_forward(cfg, params, x, cam, S, B, HW, C)  # (S//B, B, 128)
    raw = raw.reshape(T, N, 4, PAD_JOINTS)
    # lanes: [0:32]=X, [32:64]=Y, [64:96]=Z (camera space), [96:128]=conf
    volume_joints = jnp.transpose(raw[:, :, 0:3, :J], (0, 1, 3, 2))  # (T,N,J,3)
    hm_conf = jnp.transpose(raw[:, :, 3:4, :J], (0, 1, 3, 2))        # (T,N,J,1)

    hand_pose_results_frames = []
    for i in range(T):
        if cfg.hand_branch:
            # TODO(synk): ik_solver_mano is an external MANO inverse-kinematics
            # optimizer with no clean Pallas equivalent; only volume joints kept.
            hand_pose_results_frames.append(
                {"volume_joints": volume_joints[i], "hm_conf": hm_conf[i]})
        else:
            hand_pose_results_frames.append(None)
    return hand_pose_results_frames


if __name__ == "__main__":
    key = jax.random.PRNGKey(0)
    kimg, _ = jax.random.split(key)
    T, N, C = 2, 2, 4
    H = W = cfg.hm_size
    img = jax.random.normal(kimg, (T, N, C, H, W), jnp.float32)
    hand_center_3d = jnp.tile(jnp.array([0.0, 0.0, 0.5], jnp.float32),
                              (T, N, 1))
    cam_intr = jnp.broadcast_to(
        jnp.array([[200.0, 0.0, 32.0],
                   [0.0, 200.0, 32.0],
                   [0.0, 0.0, 1.0]], jnp.float32), (T, N, 3, 3))

    params = init_params(jax.random.PRNGKey(42), cfg, C)
    inputs = {"img": img}
    metas = {"hand_center_3d": hand_center_3d, "cam_intr": cam_intr}

    results = pose_model_forward(cfg, params, inputs, metas)
    jax.block_until_ready(results[-1]["volume_joints"])
    assert results[-1]["volume_joints"].shape == (N, 21, 3)
    assert results[-1]["hm_conf"].shape == (N, 21, 1)
    print("KERNEL_OK")
</pallas_src>

<mosaic_0001>
module attributes {stable_mosaic.version = 11 : i64} {
  func.func @_fused_pose_kernel(%arg0: i32, %arg1: memref<128x4xbf16, #tpu.memory_space<vmem>>, %arg2: memref<4x32xbf16, #tpu.memory_space<vmem>>, %arg3: memref<1x32xf32, #tpu.memory_space<vmem>>, %arg4: memref<32x32xbf16, #tpu.memory_space<vmem>>, %arg5: memref<1x32xf32, #tpu.memory_space<vmem>>, %arg6: memref<32x256xbf16, #tpu.memory_space<vmem>>, %arg7: memref<1x256xf32, #tpu.memory_space<vmem>>, %arg8: memref<8x64xf32, #tpu.memory_space<vmem>>, %arg9: memref<256x64xf32, #tpu.memory_space<vmem>>, %arg10: memref<1x2x8xf32, #tpu.memory_space<vmem>>, %arg11: memref<1x2x128xf32, #tpu.memory_space<vmem>>) attributes {dimension_semantics = [#tpu.dimension_semantics<parallel>], iteration_bounds = array<i64: 2>, scalar_prefetch = 0 : i64, scratch_operands = 0 : i64, tpu.core_type = #tpu.core_type<tc>, window_params = [{transform_indices = @transform_0, window_bounds = array<i64: 128, 4>}, {pipeline_mode = #tpu.pipeline_mode<synchronous>, transform_indices = @transform_1, window_bounds = array<i64: 4, 32>}, {pipeline_mode = #tpu.pipeline_mode<synchronous>, transform_indices = @transform_2, window_bounds = array<i64: 1, 32>}, {pipeline_mode = #tpu.pipeline_mode<synchronous>, transform_indices = @transform_3, window_bounds = array<i64: 32, 32>}, {pipeline_mode = #tpu.pipeline_mode<synchronous>, transform_indices = @transform_4, window_bounds = array<i64: 1, 32>}, {pipeline_mode = #tpu.pipeline_mode<synchronous>, transform_indices = @transform_5, window_bounds = array<i64: 32, 256>}, {pipeline_mode = #tpu.pipeline_mode<synchronous>, transform_indices = @transform_6, window_bounds = array<i64: 1, 256>}, {pipeline_mode = #tpu.pipeline_mode<synchronous>, transform_indices = @transform_7, window_bounds = array<i64: 8, 64>}, {pipeline_mode = #tpu.pipeline_mode<synchronous>, transform_indices = @transform_8, window_bounds = array<i64: 256, 64>}, {transform_indices = @transform_9, window_bounds = array<i64: 1, 2, 8>}, {transform_indices = @transform_10, window_bounds = array<i64: 1, 2, 128>}]} {
    %c0 = arith.constant 0 : index
    %c0_0 = arith.constant 0 : index
    %0 = vector.load %arg1[%c0, %c0_0] : memref<128x4xbf16, #tpu.memory_space<vmem>>, vector<128x4xbf16>
    %c0_1 = arith.constant 0 : index
    %c0_2 = arith.constant 0 : index
    %1 = vector.load %arg2[%c0_1, %c0_2] : memref<4x32xbf16, #tpu.memory_space<vmem>>, vector<4x32xbf16>
    %cst = arith.constant dense<0.000000e+00> : vector<128x32xf32>
    %2 = tpu.matmul %0, %1, %cst {dimension_numbers = #tpu.dot_dimension_numbers<[1], [0], [0], [1], [0, 0, 1, 1], [], []>} : vector<128x4xbf16>, vector<4x32xbf16>, vector<128x32xf32> -> vector<128x32xf32>
    %c0_3 = arith.constant 0 : index
    %c0_4 = arith.constant 0 : index
    %3 = vector.load %arg3[%c0_3, %c0_4] : memref<1x32xf32, #tpu.memory_space<vmem>>, vector<1x32xf32>
    %4 = vector.broadcast %3 : vector<1x32xf32> to vector<128x32xf32>
    %5 = arith.addf %2, %4 : vector<128x32xf32>
    %cst_5 = arith.constant 0.000000e+00 : f32
    %6 = vector.broadcast %cst_5 : f32 to vector<128x32xf32>
    %7 = arith.maximumf %5, %6 : vector<128x32xf32>
    %8 = arith.truncf %7 : vector<128x32xf32> to vector<128x32xbf16>
    %c0_6 = arith.constant 0 : index
    %c0_7 = arith.constant 0 : index
    %9 = vector.load %arg4[%c0_6, %c0_7] : memref<32x32xbf16, #tpu.memory_space<vmem>>, vector<32x32xbf16>
    %cst_8 = arith.constant dense<0.000000e+00> : vector<128x32xf32>
    %10 = tpu.matmul %8, %9, %cst_8 {dimension_numbers = #tpu.dot_dimension_numbers<[1], [0], [0], [1], [0, 0, 1, 1], [], []>} : vector<128x32xbf16>, vector<32x32xbf16>, vector<128x32xf32> -> vector<128x32xf32>
    %c0_9 = arith.constant 0 : index
    %c0_10 = arith.constant 0 : index
    %11 = vector.load %arg5[%c0_9, %c0_10] : memref<1x32xf32, #tpu.memory_space<vmem>>, vector<1x32xf32>
    %12 = vector.broadcast %11 : vector<1x32xf32> to vector<128x32xf32>
    %13 = arith.addf %10, %12 : vector<128x32xf32>
    %cst_11 = arith.constant 0.000000e+00 : f32
    %14 = vector.broadcast %cst_11 : f32 to vector<128x32xf32>
    %15 = arith.maximumf %13, %14 : vector<128x32xf32>
    %16 = arith.truncf %15 : vector<128x32xf32> to vector<128x32xbf16>
    %c0_12 = arith.constant 0 : index
    %c0_13 = arith.constant 0 : index
    %17 = vector.load %arg6[%c0_12, %c0_13] : memref<32x256xbf16, #tpu.memory_space<vmem>>, vector<32x256xbf16>
    %cst_14 = arith.constant dense<0.000000e+00> : vector<128x256xf32>
    %18 = tpu.matmul %16, %17, %cst_14 {dimension_numbers = #tpu.dot_dimension_numbers<[1], [0], [0], [1], [0, 0, 1, 1], [], []>} : vector<128x32xbf16>, vector<32x256xbf16>, vector<128x256xf32> -> vector<128x256xf32>
    %c0_15 = arith.constant 0 : index
    %c0_16 = arith.constant 0 : index
    %19 = vector.load %arg7[%c0_15, %c0_16] : memref<1x256xf32, #tpu.memory_space<vmem>>, vector<1x256xf32>
    %20 = vector.broadcast %19 : vector<1x256xf32> to vector<128x256xf32>
    %21 = arith.addf %18, %20 : vector<128x256xf32>
    %c0_17 = arith.constant 0 : index
    %c0_18 = arith.constant 0 : index
    %22 = vector.load %arg8[%c0_17, %c0_18] : memref<8x64xf32, #tpu.memory_space<vmem>>, vector<8x64xf32>
    %c0_19 = arith.constant 0 : index
    %c0_20 = arith.constant 0 : index
    %23 = vector.load %arg9[%c0_19, %c0_20] : memref<256x64xf32, #tpu.memory_space<vmem>>, vector<256x64xf32>
    %c0_21 = arith.constant 0 : index
    %c0_22 = arith.constant 0 : index
    %c0_23 = arith.constant 0 : index
    %24 = vector.load %arg10[%c0_21, %c0_22, %c0_23] : memref<1x2x8xf32, #tpu.memory_space<vmem>>, vector<1x2x8xf32>
    %25 = vector.shape_cast %24 : vector<1x2x8xf32> to vector<2x8xf32>
    %26 = vector.extract_strided_slice %21 {offsets = [0, 0], sizes = [64, 256], strides = [1, 1]} : vector<128x256xf32> to vector<64x256xf32>
    %cst_24 = arith.constant dense<0xFF800000> : vector<256xf32>
    %27 = vector.multi_reduction <maximumf>, %26, %cst_24 [0] : vector<64x256xf32> to vector<256xf32>
    %28 = vector.shape_cast %27 : vector<256xf32> to vector<1x256xf32>
    %29 = vector.extract_strided_slice %28 {offsets = [0, 0], sizes = [1, 32], strides = [1, 1]} : vector<1x256xf32> to vector<1x32xf32>
    %30 = vector.extract_strided_slice %28 {offsets = [0, 32], sizes = [1, 32], strides = [1, 1]} : vector<1x256xf32> to vector<1x32xf32>
    %31 = arith.maximumf %29, %30 : vector<1x32xf32>
    %32 = vector.extract_strided_slice %28 {offsets = [0, 64], sizes = [1, 32], strides = [1, 1]} : vector<1x256xf32> to vector<1x32xf32>
    %33 = arith.maximumf %31, %32 : vector<1x32xf32>
    %34 = vector.extract_strided_slice %28 {offsets = [0, 96], sizes = [1, 32], strides = [1, 1]} : vector<1x256xf32> to vector<1x32xf32>
    %35 = arith.maximumf %33, %34 : vector<1x32xf32>
    %36 = vector.extract_strided_slice %28 {offsets = [0, 128], sizes = [1, 32], strides = [1, 1]} : vector<1x256xf32> to vector<1x32xf32>
    %37 = arith.maximumf %35, %36 : vector<1x32xf32>
    %38 = vector.extract_strided_slice %28 {offsets = [0, 160], sizes = [1, 32], strides = [1, 1]} : vector<1x256xf32> to vector<1x32xf32>
    %39 = arith.maximumf %37, %38 : vector<1x32xf32>
    %40 = vector.extract_strided_slice %28 {offsets = [0, 192], sizes = [1, 32], strides = [1, 1]} : vector<1x256xf32> to vector<1x32xf32>
    %41 = arith.maximumf %39, %40 : vector<1x32xf32>
    %42 = vector.extract_strided_slice %28 {offsets = [0, 224], sizes = [1, 32], strides = [1, 1]} : vector<1x256xf32> to vector<1x32xf32>
    %43 = arith.maximumf %41, %42 : vector<1x32xf32>
    %44 = tpu.concatenate %43, %43, %43, %43, %43, %43, %43, %43 in 1 : vector<1x32xf32>, vector<1x32xf32>, vector<1x32xf32>, vector<1x32xf32>, vector<1x32xf32>, vector<1x32xf32>, vector<1x32xf32>, vector<1x32xf32> -> vector<1x256xf32>
    %45 = vector.broadcast %44 : vector<1x256xf32> to vector<64x256xf32>
    %46 = arith.subf %26, %45 : vector<64x256xf32>
    %47 = math.exp %46 : vector<64x256xf32>
    %cst_25 = arith.constant dense<0.000000e+00> : vector<8x256xf32>
    %48 = tpu.matmul %22, %47, %cst_25 {dimension_numbers = #tpu.dot_dimension_numbers<[1], [0], [0], [1], [0, 0, 1, 1], [], []>} : vector<8x64xf32>, vector<64x256xf32>, vector<8x256xf32> -> vector<8x256xf32>
    %cst_26 = arith.constant dense<0.000000e+00> : vector<8x64xf32>
    %49 = tpu.matmul %48, %23, %cst_26 {dimension_numbers = #tpu.dot_dimension_numbers<[1], [0], [0], [1], [0, 0, 1, 1], [], []>} : vector<8x256xf32>, vector<256x64xf32>, vector<8x64xf32> -> vector<8x64xf32>
    %50 = vector.extract_strided_slice %49 {offsets = [0, 0], sizes = [1, 32], strides = [1, 1]} : vector<8x64xf32> to vector<1x32xf32>
    %51 = vector.extract_strided_slice %49 {offsets = [1, 0], sizes = [1, 32], strides = [1, 1]} : vector<8x64xf32> to vector<1x32xf32>
    %52 = vector.extract_strided_slice %49 {offsets = [2, 0], sizes = [1, 32], strides = [1, 1]} : vector<8x64xf32> to vector<1x32xf32>
    %53 = vector.extract_strided_slice %49 {offsets = [0, 32], sizes = [1, 32], strides = [1, 1]} : vector<8x64xf32> to vector<1x32xf32>
    %54 = tpu.reciprocal %50 : vector<1x32xf32> -> vector<1x32xf32>
    %55 = arith.mulf %51, %54 : vector<1x32xf32>
    %56 = arith.mulf %52, %54 : vector<1x32xf32>
    %57 = arith.mulf %53, %54 : vector<1x32xf32>
    %58 = vector.extract_strided_slice %25 {offsets = [0, 0], sizes = [1, 1], strides = [1, 1]} : vector<2x8xf32> to vector<1x1xf32>
    %59 = vector.extract_strided_slice %25 {offsets = [0, 1], sizes = [1, 1], strides = [1, 1]} : vector<2x8xf32> to vector<1x1xf32>
    %60 = vector.extract_strided_slice %25 {offsets = [0, 2], sizes = [1, 1], strides = [1, 1]} : vector<2x8xf32> to vector<1x1xf32>
    %61 = vector.extract_strided_slice %25 {offsets = [0, 3], sizes = [1, 1], strides = [1, 1]} : vector<2x8xf32> to vector<1x1xf32>
    %62 = vector.extract_strided_slice %25 {offsets = [0, 4], sizes = [1, 1], strides = [1, 1]} : vector<2x8xf32> to vector<1x1xf32>
    %cst_27 = arith.constant 2.500000e-01 : f32
    %63 = vector.broadcast %cst_27 : f32 to vector<1x32xf32>
    %64 = arith.mulf %57, %63 : vector<1x32xf32>
    %cst_28 = arith.constant 1.000000e+00 : f32
    %65 = vector.broadcast %cst_28 : f32 to vector<1x32xf32>
    %66 = arith.subf %64, %65 : vector<1x32xf32>
    %cst_29 = arith.constant 2.000000e-01 : f32
    %67 = vector.broadcast %cst_29 : f32 to vector<1x32xf32>
    %68 = arith.mulf %66, %67 : vector<1x32xf32>
    %69 = vector.broadcast %62 : vector<1x1xf32> to vector<1x32xf32>
    %70 = arith.addf %68, %69 : vector<1x32xf32>
    %cst_30 = arith.constant 8.000000e+00 : f32
    %71 = vector.broadcast %cst_30 : f32 to vector<1x32xf32>
    %72 = arith.mulf %55, %71 : vector<1x32xf32>
    %73 = vector.broadcast %60 : vector<1x1xf32> to vector<1x32xf32>
    %74 = arith.subf %72, %73 : vector<1x32xf32>
    %75 = vector.broadcast %58 : vector<1x1xf32> to vector<1x32xf32>
    %76 = arith.mulf %74, %75 : vector<1x32xf32>
    %77 = arith.mulf %76, %70 : vector<1x32xf32>
    %cst_31 = arith.constant 8.000000e+00 : f32
    %78 = vector.broadcast %cst_31 : f32 to vector<1x32xf32>
    %79 = arith.mulf %56, %78 : vector<1x32xf32>
    %80 = vector.broadcast %61 : vector<1x1xf32> to vector<1x32xf32>
    %81 = arith.subf %79, %80 : vector<1x32xf32>
    %82 = vector.broadcast %59 : vector<1x1xf32> to vector<1x32xf32>
    %83 = arith.mulf %81, %82 : vector<1x32xf32>
    %84 = arith.mulf %83, %70 : vector<1x32xf32>
    %85 = tpu.concatenate %77, %84, %70, %54 in 1 : vector<1x32xf32>, vector<1x32xf32>, vector<1x32xf32>, vector<1x32xf32> -> vector<1x128xf32>
    %86 = vector.extract_strided_slice %21 {offsets = [64, 0], sizes = [64, 256], strides = [1, 1]} : vector<128x256xf32> to vector<64x256xf32>
    %cst_32 = arith.constant dense<0xFF800000> : vector<256xf32>
    %87 = vector.multi_reduction <maximumf>, %86, %cst_32 [0] : vector<64x256xf32> to vector<256xf32>
    %88 = vector.shape_cast %87 : vector<256xf32> to vector<1x256xf32>
    %89 = vector.extract_strided_slice %88 {offsets = [0, 0], sizes = [1, 32], strides = [1, 1]} : vector<1x256xf32> to vector<1x32xf32>
    %90 = vector.extract_strided_slice %88 {offsets = [0, 32], sizes = [1, 32], strides = [1, 1]} : vector<1x256xf32> to vector<1x32xf32>
    %91 = arith.maximumf %89, %90 : vector<1x32xf32>
    %92 = vector.extract_strided_slice %88 {offsets = [0, 64], sizes = [1, 32], strides = [1, 1]} : vector<1x256xf32> to vector<1x32xf32>
    %93 = arith.maximumf %91, %92 : vector<1x32xf32>
    %94 = vector.extract_strided_slice %88 {offsets = [0, 96], sizes = [1, 32], strides = [1, 1]} : vector<1x256xf32> to vector<1x32xf32>
    %95 = arith.maximumf %93, %94 : vector<1x32xf32>
    %96 = vector.extract_strided_slice %88 {offsets = [0, 128], sizes = [1, 32], strides = [1, 1]} : vector<1x256xf32> to vector<1x32xf32>
    %97 = arith.maximumf %95, %96 : vector<1x32xf32>
    %98 = vector.extract_strided_slice %88 {offsets = [0, 160], sizes = [1, 32], strides = [1, 1]} : vector<1x256xf32> to vector<1x32xf32>
    %99 = arith.maximumf %97, %98 : vector<1x32xf32>
    %100 = vector.extract_strided_slice %88 {offsets = [0, 192], sizes = [1, 32], strides = [1, 1]} : vector<1x256xf32> to vector<1x32xf32>
    %101 = arith.maximumf %99, %100 : vector<1x32xf32>
    %102 = vector.extract_strided_slice %88 {offsets = [0, 224], sizes = [1, 32], strides = [1, 1]} : vector<1x256xf32> to vector<1x32xf32>
    %103 = arith.maximumf %101, %102 : vector<1x32xf32>
    %104 = tpu.concatenate %103, %103, %103, %103, %103, %103, %103, %103 in 1 : vector<1x32xf32>, vector<1x32xf32>, vector<1x32xf32>, vector<1x32xf32>, vector<1x32xf32>, vector<1x32xf32>, vector<1x32xf32>, vector<1x32xf32> -> vector<1x256xf32>
    %105 = vector.broadcast %104 : vector<1x256xf32> to vector<64x256xf32>
    %106 = arith.subf %86, %105 : vector<64x256xf32>
    %107 = math.exp %106 : vector<64x256xf32>
    %cst_33 = arith.constant dense<0.000000e+00> : vector<8x256xf32>
    %108 = tpu.matmul %22, %107, %cst_33 {dimension_numbers = #tpu.dot_dimension_numbers<[1], [0], [0], [1], [0, 0, 1, 1], [], []>} : vector<8x64xf32>, vector<64x256xf32>, vector<8x256xf32> -> vector<8x256xf32>
    %cst_34 = arith.constant dense<0.000000e+00> : vector<8x64xf32>
    %109 = tpu.matmul %108, %23, %cst_34 {dimension_numbers = #tpu.dot_dimension_numbers<[1], [0], [0], [1], [0, 0, 1, 1], [], []>} : vector<8x256xf32>, vector<256x64xf32>, vector<8x64xf32> -> vector<8x64xf32>
    %110 = vector.extract_strided_slice %109 {offsets = [0, 0], sizes = [1, 32], strides = [1, 1]} : vector<8x64xf32> to vector<1x32xf32>
    %111 = vector.extract_strided_slice %109 {offsets = [1, 0], sizes = [1, 32], strides = [1, 1]} : vector<8x64xf32> to vector<1x32xf32>
    %112 = vector.extract_strided_slice %109 {offsets = [2, 0], sizes = [1, 32], strides = [1, 1]} : vector<8x64xf32> to vector<1x32xf32>
    %113 = vector.extract_strided_slice %109 {offsets = [0, 32], sizes = [1, 32], strides = [1, 1]} : vector<8x64xf32> to vector<1x32xf32>
    %114 = tpu.reciprocal %110 : vector<1x32xf32> -> vector<1x32xf32>
    %115 = arith.mulf %111, %114 : vector<1x32xf32>
    %116 = arith.mulf %112, %114 : vector<1x32xf32>
    %117 = arith.mulf %113, %114 : vector<1x32xf32>
    %118 = vector.extract_strided_slice %25 {offsets = [1, 0], sizes = [1, 1], strides = [1, 1]} : vector<2x8xf32> to vector<1x1xf32>
    %119 = vector.extract_strided_slice %25 {offsets = [1, 1], sizes = [1, 1], strides = [1, 1]} : vector<2x8xf32> to vector<1x1xf32>
    %120 = vector.extract_strided_slice %25 {offsets = [1, 2], sizes = [1, 1], strides = [1, 1]} : vector<2x8xf32> to vector<1x1xf32>
    %121 = vector.extract_strided_slice %25 {offsets = [1, 3], sizes = [1, 1], strides = [1, 1]} : vector<2x8xf32> to vector<1x1xf32>
    %122 = vector.extract_strided_slice %25 {offsets = [1, 4], sizes = [1, 1], strides = [1, 1]} : vector<2x8xf32> to vector<1x1xf32>
    %cst_35 = arith.constant 2.500000e-01 : f32
    %123 = vector.broadcast %cst_35 : f32 to vector<1x32xf32>
    %124 = arith.mulf %117, %123 : vector<1x32xf32>
    %cst_36 = arith.constant 1.000000e+00 : f32
    %125 = vector.broadcast %cst_36 : f32 to vector<1x32xf32>
    %126 = arith.subf %124, %125 : vector<1x32xf32>
    %cst_37 = arith.constant 2.000000e-01 : f32
    %127 = vector.broadcast %cst_37 : f32 to vector<1x32xf32>
    %128 = arith.mulf %126, %127 : vector<1x32xf32>
    %129 = vector.broadcast %122 : vector<1x1xf32> to vector<1x32xf32>
    %130 = arith.addf %128, %129 : vector<1x32xf32>
    %cst_38 = arith.constant 8.000000e+00 : f32
    %131 = vector.broadcast %cst_38 : f32 to vector<1x32xf32>
    %132 = arith.mulf %115, %131 : vector<1x32xf32>
    %133 = vector.broadcast %120 : vector<1x1xf32> to vector<1x32xf32>
    %134 = arith.subf %132, %133 : vector<1x32xf32>
    %135 = vector.broadcast %118 : vector<1x1xf32> to vector<1x32xf32>
    %136 = arith.mulf %134, %135 : vector<1x32xf32>
    %137 = arith.mulf %136, %130 : vector<1x32xf32>
    %cst_39 = arith.constant 8.000000e+00 : f32
    %138 = vector.broadcast %cst_39 : f32 to vector<1x32xf32>
    %139 = arith.mulf %116, %138 : vector<1x32xf32>
    %140 = vector.broadcast %121 : vector<1x1xf32> to vector<1x32xf32>
    %141 = arith.subf %139, %140 : vector<1x32xf32>
    %142 = vector.broadcast %119 : vector<1x1xf32> to vector<1x32xf32>
    %143 = arith.mulf %141, %142 : vector<1x32xf32>
    %144 = arith.mulf %143, %130 : vector<1x32xf32>
    %145 = tpu.concatenate %137, %144, %130, %114 in 1 : vector<1x32xf32>, vector<1x32xf32>, vector<1x32xf32>, vector<1x32xf32> -> vector<1x128xf32>
    %146 = tpu.concatenate %85, %145 in 0 : vector<1x128xf32>, vector<1x128xf32> -> vector<2x128xf32>
    %c0_40 = arith.constant 0 : index
    %c0_41 = arith.constant 0 : index
    %c0_42 = arith.constant 0 : index
    %147 = vector.load %arg11[%c0_40, %c0_41, %c0_42] : memref<1x2x128xf32, #tpu.memory_space<vmem>>, vector<1x2x128xf32>
    %148 = vector.shape_cast %147 : vector<1x2x128xf32> to vector<2x128xf32>
    %149 = vector.shape_cast %146 : vector<2x128xf32> to vector<1x2x128xf32>
    tpu.vector_store %arg11[%c0_40, %c0_41, %c0_42], %149 {strides = array<i32>} : memref<1x2x128xf32, #tpu.memory_space<vmem>>, vector<1x2x128xf32>,
    return
  }
  func.func @transform_0(%arg0: i32) -> (i32, i32) {
    %c0_i32 = arith.constant 0 : i32
    %c0_i32_0 = arith.constant 0 : i32
    return %arg0, %c0_i32 : i32, i32
  }
  func.func @transform_1(%arg0: i32) -> (i32, i32) {
    %c0_i32 = arith.constant 0 : i32
    %c0_i32_0 = arith.constant 0 : i32
    %c0_i32_1 = arith.constant 0 : i32
    return %c0_i32, %c0_i32_0 : i32, i32
  }
  func.func @transform_2(%arg0: i32) -> (i32, i32) {
    %c0_i32 = arith.constant 0 : i32
    %c0_i32_0 = arith.constant 0 : i32
    %c0_i32_1 = arith.constant 0 : i32
    return %c0_i32, %c0_i32_0 : i32, i32
  }
  func.func @transform_3(%arg0: i32) -> (i32, i32) {
    %c0_i32 = arith.constant 0 : i32
    %c0_i32_0 = arith.constant 0 : i32
    %c0_i32_1 = arith.constant 0 : i32
    return %c0_i32, %c0_i32_0 : i32, i32
  }
  func.func @transform_4(%arg0: i32) -> (i32, i32) {
    %c0_i32 = arith.constant 0 : i32
    %c0_i32_0 = arith.constant 0 : i32
    %c0_i32_1 = arith.constant 0 : i32
    return %c0_i32, %c0_i32_0 : i32, i32
  }
  func.func @transform_5(%arg0: i32) -> (i32, i32) {
    %c0_i32 = arith.constant 0 : i32
    %c0_i32_0 = arith.constant 0 : i32
    %c0_i32_1 = arith.constant 0 : i32
    return %c0_i32, %c0_i32_0 : i32, i32
  }
  func.func @transform_6(%arg0: i32) -> (i32, i32) {
    %c0_i32 = arith.constant 0 : i32
    %c0_i32_0 = arith.constant 0 : i32
    %c0_i32_1 = arith.constant 0 : i32
    return %c0_i32, %c0_i32_0 : i32, i32
  }
  func.func @transform_7(%arg0: i32) -> (i32, i32) {
    %c0_i32 = arith.constant 0 : i32
    %c0_i32_0 = arith.constant 0 : i32
    %c0_i32_1 = arith.constant 0 : i32
    return %c0_i32, %c0_i32_0 : i32, i32
  }
  func.func @transform_8(%arg0: i32) -> (i32, i32) {
    %c0_i32 = arith.constant 0 : i32
    %c0_i32_0 = arith.constant 0 : i32
    %c0_i32_1 = arith.constant 0 : i32
    return %c0_i32, %c0_i32_0 : i32, i32
  }
  func.func @transform_9(%arg0: i32) -> (i32, i32, i32) {
    %c0_i32 = arith.constant 0 : i32
    %c0_i32_0 = arith.constant 0 : i32
    %c0_i32_1 = arith.constant 0 : i32
    return %arg0, %c0_i32, %c0_i32_0 : i32, i32, i32
  }
  func.func @transform_10(%arg0: i32) -> (i32, i32, i32) {
    %c0_i32 = arith.constant 0 : i32
    %c0_i32_0 = arith.constant 0 : i32
    %c0_i32_1 = arith.constant 0 : i32
    return %arg0, %c0_i32, %c0_i32_0 : i32, i32, i32
  }
}

</mosaic_0001>

<llo_original>
// kernel: tpu_custom_call.1
$region0: #{tpu_custom_call.1}
  #allocation0 [shape = 'u32[]', space=smem, size = 0x4, offset = 0x4, fixed_abs, tag = 'smem constant byte address 0x4 - core index']
  #allocation1 [shape = 'u32[72,128]{1,0:T(1,128)}', space=vmem, size = 0x9000, scoped, tag = 'internal scratch']
  %s0 = inlined_call_operand.vmem [shape: bf16[256,4], index: 0, kind: input, shape index: {}]
  %s1 = inlined_call_operand.vmem [shape: bf16[4,32], index: 1, kind: input, shape index: {}]
  %s2 = inlined_call_operand.vmem [shape: f32[1,32], index: 2, kind: input, shape index: {}]
  %s3 = inlined_call_operand.vmem [shape: bf16[32,32], index: 3, kind: input, shape index: {}]
  %s4 = inlined_call_operand.vmem [shape: f32[1,32], index: 4, kind: input, shape index: {}]
  %s5 = inlined_call_operand.vmem [shape: bf16[32,256], index: 5, kind: input, shape index: {}]
  %s6 = inlined_call_operand.vmem [shape: f32[1,256], index: 6, kind: input, shape index: {}]
  %s7 = inlined_call_operand.vmem [shape: f32[8,64], index: 7, kind: input, shape index: {}]
  %s8 = inlined_call_operand.vmem [shape: f32[256,64], index: 8, kind: input, shape index: {}]
  %s9 = inlined_call_operand.vmem [shape: f32[2,2,8], index: 9, kind: input, shape index: {}]
  %s10 = inlined_call_operand.hbm [shape: f32[2,2,128], index: 10, kind: output, shape index: {}]
  %s11 = sld [smem:[#allocation0]]
  $region73: #{tpu_custom_call.1} parent=0
    _
  %s13 = ssub.s32 1, %s11
  %s14 = scalar_select 0, %s13, %s11
  $region1: #{tpu_custom_call.1} parent=0
    #allocation2 [shape = 'u8[2048]{0}', space=vmem, size = 0x800, scoped, tag = 'output window, operand 0']
    #allocation3 [shape = 's32[2]{0}', space=sflag, size = 0x8, scoped, tag = 'scoped memory for tpu_custom_call.1']
    %15 = vsyncpa [#allocation3], 0
    %s16 = scalar_lea.sflag [#allocation3], 1
    %17 = vsyncpa %s16, 0
    loop: start=0, step=1, limit=4
    $region2: #{tpu_custom_call.1} parent=1 // loop_pre_header
      _
    $region3: #{tpu_custom_call.1} parent=1 // loop_header
      %s19 = sphi 0, %s23
      %p20 = scmp.ge.s32.totalorder %s19, 4
      %s29 = sphi 0, %s31
      %s32 = sphi 0, %s29
      %s33 = sphi 0, %s32
      %s49 = sphi 0, %s33
      %s53 = sphi 0, %s53
      %s55 = sphi 0, %s53
      %s56 = sphi 0, %s55
      %s70 = sphi 0, %s56
      %s74 = sphi 0, %s74
      %s76 = sphi 0, %s74
      %s77 = sphi 0, %s76
      %s91 = sphi 0, %s77
      %s95 = sphi 0, %s95
      %s97 = sphi 0, %s95
      %s98 = sphi 0, %s97
      %s112 = sphi 0, %s98
      %s116 = sphi 0, %s116
      %s118 = sphi 0, %s116
      %s119 = sphi 0, %s118
      %s133 = sphi 0, %s119
      %s137 = sphi 0, %s137
      %s139 = sphi 0, %s137
      %s140 = sphi 0, %s139
      %s154 = sphi 0, %s140
      %s158 = sphi 0, %s158
      %s160 = sphi 0, %s158
      %s161 = sphi 0, %s160
      %s175 = sphi 0, %s161
      %s179 = sphi 0, %s179
      %s181 = sphi 0, %s179
      %s182 = sphi 0, %s181
      %s196 = sphi 0, %s182
      %s200 = sphi 0, %s200
      %s202 = sphi 0, %s200
      %s203 = sphi 0, %s202
      %s217 = sphi 0, %s203
      %s223 = sphi 0, %s225
      %s226 = sphi 0, %s223
      %s227 = sphi 0, %s226
      %s243 = sphi 0, %s227
      %s249 = sphi 0, %s251
      %s252 = sphi 0, %s249
      %s253 = sphi 0, %s252
      %s269 = sphi 0, %s253
    $region4: #{tpu_custom_call.1} parent=1 // loop_header_branch
      %22 = sbr.rel (%p20) target = $region8
    $region5: #{tpu_custom_call.1} parent=1 // loop_body
      %s24 = ssub.s32 %s19, 1
      %s25 = ssub.s32 %s19, 2
      %s26 = sadd.s32 %s19, 1
      %s27 = ssub.s32 %s19, %s26
      %p28 = scmp.eq.s32.totalorder %s27, 0
      %s30 = sadd.s32 %s29, 1
      %s31 = scalar_select %p28, %s29, %s30
      %p34 = pneg %p28
      %p35 = scmp.eq.s32.totalorder %s19, 1
      %p36 = por %p34, %p35
      %p37 = scmp.ne.s32.totalorder %s29, %s32
      %p38 = scmp.eq.s32.totalorder %s19, 0
      %p39 = por %p37, %p38
      %p40 = scmp.ne.s32.totalorder %s29, %s32
      %p41 = scmp.eq.s32.totalorder %s24, 1
      %p42 = por %p40, %p41
      %p43 = scmp.ne.s32.totalorder %s32, %s33
      %p44 = scmp.eq.s32.totalorder %s24, 0
      %p45 = por %p43, %p44
      %p46 = scmp.ne.s32.totalorder %s32, %s33
      %p47 = scmp.eq.s32.totalorder %s25, 1
      %p48 = por %p46, %p47
      %p50 = scmp.ne.s32.totalorder %s33, %s49
      %p51 = scmp.eq.s32.totalorder %s25, 0
      %p52 = por %p50, %p51
      %s54 = sadd.s32 %s53, 1
      %p57 = scmp.eq.s32.totalorder %s19, 1
      %p58 = scmp.ne.s32.totalorder %s53, %s55
      %p59 = scmp.eq.s32.totalorder %s19, 0
      %p60 = por %p58, %p59
      %p61 = scmp.ne.s32.totalorder %s53, %s55
      %p62 = scmp.eq.s32.totalorder %s24, 1
      %p63 = por %p61, %p62
      %p64 = scmp.ne.s32.totalorder %s55, %s56
      %p65 = scmp.eq.s32.totalorder %s24, 0
      %p66 = por %p64, %p65
      %p67 = scmp.ne.s32.totalorder %s55, %s56
      %p68 = scmp.eq.s32.totalorder %s25, 1
      %p69 = por %p67, %p68
      %p71 = scmp.ne.s32.totalorder %s56, %s70
      %p72 = scmp.eq.s32.totalorder %s25, 0
      %p73 = por %p71, %p72
      %s75 = sadd.s32 %s74, 1
      %p78 = scmp.eq.s32.totalorder %s19, 1
      %p79 = scmp.ne.s32.totalorder %s74, %s76
      %p80 = scmp.eq.s32.totalorder %s19, 0
      %p81 = por %p79, %p80
      %p82 = scmp.ne.s32.totalorder %s74, %s76
      %p83 = scmp.eq.s32.totalorder %s24, 1
      %p84 = por %p82, %p83
      %p85 = scmp.ne.s32.totalorder %s76, %s77
      %p86 = scmp.eq.s32.totalorder %s24, 0
      %p87 = por %p85, %p86
      %p88 = scmp.ne.s32.totalorder %s76, %s77
      %p89 = scmp.eq.s32.totalorder %s25, 1
      %p90 = por %p88, %p89
      %p92 = scmp.ne.s32.totalorder %s77, %s91
      %p93 = scmp.eq.s32.totalorder %s25, 0
      %p94 = por %p92, %p93
      %s96 = sadd.s32 %s95, 1
      %p99 = scmp.eq.s32.totalorder %s19, 1
      %p100 = scmp.ne.s32.totalorder %s95, %s97
      %p101 = scmp.eq.s32.totalorder %s19, 0
      %p102 = por %p100, %p101
      %p103 = scmp.ne.s32.totalorder %s95, %s97
      %p104 = scmp.eq.s32.totalorder %s24, 1
      %p105 = por %p103, %p104
      %p106 = scmp.ne.s32.totalorder %s97, %s98
      %p107 = scmp.eq.s32.totalorder %s24, 0
      %p108 = por %p106, %p107
      %p109 = scmp.ne.s32.totalorder %s97, %s98
      %p110 = scmp.eq.s32.totalorder %s25, 1
      %p111 = por %p109, %p110
      %p113 = scmp.ne.s32.totalorder %s98, %s112
      %p114 = scmp.eq.s32.totalorder %s25, 0
      %p115 = por %p113, %p114
      %s117 = sadd.s32 %s116, 1
      %p120 = scmp.eq.s32.totalorder %s19, 1
      %p121 = scmp.ne.s32.totalorder %s116, %s118
      %p122 = scmp.eq.s32.totalorder %s19, 0
      %p123 = por %p121, %p122
      %p124 = scmp.ne.s32.totalorder %s116, %s118
      %p125 = scmp.eq.s32.totalorder %s24, 1
      %p126 = por %p124, %p125
      %p127 = scmp.ne.s32.totalorder %s118, %s119
      %p128 = scmp.eq.s32.totalorder %s24, 0
      %p129 = por %p127, %p128
      %p130 = scmp.ne.s32.totalorder %s118, %s119
      %p131 = scmp.eq.s32.totalorder %s25, 1
      %p132 = por %p130, %p131
      %p134 = scmp.ne.s32.totalorder %s119, %s133
      %p135 = scmp.eq.s32.totalorder %s25, 0
      %p136 = por %p134, %p135
      %s138 = sadd.s32 %s137, 1
      %p141 = scmp.eq.s32.totalorder %s19, 1
      %p142 = scmp.ne.s32.totalorder %s137, %s139
      %p143 = scmp.eq.s32.totalorder %s19, 0
      %p144 = por %p142, %p143
      %p145 = scmp.ne.s32.totalorder %s137, %s139
      %p146 = scmp.eq.s32.totalorder %s24, 1
      %p147 = por %p145, %p146
      %p148 = scmp.ne.s32.totalorder %s139, %s140
      %p149 = scmp.eq.s32.totalorder %s24, 0
      %p150 = por %p148, %p149
      %p151 = scmp.ne.s32.totalorder %s139, %s140
      %p152 = scmp.eq.s32.totalorder %s25, 1
      %p153 = por %p151, %p152
      %p155 = scmp.ne.s32.totalorder %s140, %s154
      %p156 = scmp.eq.s32.totalorder %s25, 0
      %p157 = por %p155, %p156
      %s159 = sadd.s32 %s158, 1
      %p162 = scmp.eq.s32.totalorder %s19, 1
      %p163 = scmp.ne.s32.totalorder %s158, %s160
      %p164 = scmp.eq.s32.totalorder %s19, 0
      %p165 = por %p163, %p164
      %p166 = scmp.ne.s32.totalorder %s158, %s160
      %p167 = scmp.eq.s32.totalorder %s24, 1
      %p168 = por %p166, %p167
      %p169 = scmp.ne.s32.totalorder %s160, %s161
      %p170 = scmp.eq.s32.totalorder %s24, 0
      %p171 = por %p169, %p170
      %p172 = scmp.ne.s32.totalorder %s160, %s161
      %p173 = scmp.eq.s32.totalorder %s25, 1
      %p174 = por %p172, %p173
      %p176 = scmp.ne.s32.totalorder %s161, %s175
      %p177 = scmp.eq.s32.totalorder %s25, 0
      %p178 = por %p176, %p177
      %s180 = sadd.s32 %s179, 1
      %p183 = scmp.eq.s32.totalorder %s19, 1
      %p184 = scmp.ne.s32.totalorder %s179, %s181
      %p185 = scmp.eq.s32.totalorder %s19, 0
      %p186 = por %p184, %p185
      %p187 = scmp.ne.s32.totalorder %s179, %s181
      %p188 = scmp.eq.s32.totalorder %s24, 1
      %p189 = por %p187, %p188
      %p190 = scmp.ne.s32.totalorder %s181, %s182
      %p191 = scmp.eq.s32.totalorder %s24, 0
      %p192 = por %p190, %p191
      %p193 = scmp.ne.s32.totalorder %s181, %s182
      %p194 = scmp.eq.s32.totalorder %s25, 1
      %p195 = por %p193, %p194
      %p197 = scmp.ne.s32.totalorder %s182, %s196
      %p198 = scmp.eq.s32.totalorder %s25, 0
      %p199 = por %p197, %p198
      %s201 = sadd.s32 %s200, 1
      %p204 = scmp.eq.s32.totalorder %s19, 1
      %p205 = scmp.ne.s32.totalorder %s200, %s202
      %p206 = scmp.eq.s32.totalorder %s19, 0
      %p207 = por %p205, %p206
      %p208 = scmp.ne.s32.totalorder %s200, %s202
      %p209 = scmp.eq.s32.totalorder %s24, 1
      %p210 = por %p208, %p209
      %p211 = scmp.ne.s32.totalorder %s202, %s203
      %p212 = scmp.eq.s32.totalorder %s24, 0
      %p213 = por %p211, %p212
      %p214 = scmp.ne.s32.totalorder %s202, %s203
      %p215 = scmp.eq.s32.totalorder %s25, 1
      %p216 = por %p214, %p215
      %p218 = scmp.ne.s32.totalorder %s203, %s217
      %p219 = scmp.eq.s32.totalorder %s25, 0
      %p220 = por %p218, %p219
      %s221 = ssub.s32 %s19, %s26
      %p222 = scmp.eq.s32.totalorder %s221, 0
      %s224 = sadd.s32 %s223, 1
      %s225 = scalar_select %p222, %s223, %s224
      %p228 = pneg %p222
      %p229 = scmp.eq.s32.totalorder %s19, 1
      %p230 = por %p228, %p229
      %p231 = scmp.ne.s32.totalorder %s223, %s226
      %p232 = scmp.eq.s32.totalorder %s19, 0
      %p233 = por %p231, %p232
      %p234 = scmp.ne.s32.totalorder %s223, %s226
      %p235 = scmp.eq.s32.totalorder %s24, 1
      %p236 = por %p234, %p235
      %p237 = scmp.ne.s32.totalorder %s226, %s227
      %p238 = scmp.eq.s32.totalorder %s24, 0
      %p239 = por %p237, %p238
      %p240 = scmp.ne.s32.totalorder %s226, %s227
      %p241 = scmp.eq.s32.totalorder %s25, 1
      %p242 = por %p240, %p241
      %p244 = scmp.ne.s32.totalorder %s227, %s243
      %p245 = scmp.eq.s32.totalorder %s25, 0
      %p246 = por %p244, %p245
      %s247 = ssub.s32 %s19, %s26
      %p248 = scmp.eq.s32.totalorder %s247, 0
      %s250 = sadd.s32 %s249, 1
      %s251 = scalar_select %p248, %s249, %s250
      %p254 = pneg %p248
      %p255 = scmp.eq.s32.totalorder %s19, 1
      %p256 = por %p254, %p255
      %p257 = scmp.ne.s32.totalorder %s249, %s252
      %p258 = scmp.eq.s32.totalorder %s19, 0
      %p259 = por %p257, %p258
      %p260 = scmp.ne.s32.totalorder %s249, %s252
      %p261 = scmp.eq.s32.totalorder %s24, 1
      %p262 = por %p260, %p261
      %p263 = scmp.ne.s32.totalorder %s252, %s253
      %p264 = scmp.eq.s32.totalorder %s24, 0
      %p265 = por %p263, %p264
      %p266 = scmp.ne.s32.totalorder %s252, %s253
      %p267 = scmp.eq.s32.totalorder %s25, 1
      %p268 = por %p266, %p267
      %p270 = scmp.ne.s32.totalorder %s253, %s269
      %p271 = scmp.eq.s32.totalorder %s25, 0
      %p272 = por %p270, %p271
      %p273 = scmp.le.s32.totalorder 1, %s19
      %p274 = scmp.lt.s32.totalorder %s19, 3
      %p275 = pnand %p273, %p274
      %p276 = pneg %p275
      // Predicated region
      $region9: #{tpu_custom_call.1} parent=5 // pred_check
        _
      $region10: #{tpu_custom_call.1} parent=5 // pred_check_branch
        %278 = sbr.rel (%p275) target = $region12
      $region11: #{tpu_custom_call.1} parent=5 // pred_region
        %s279 = ssub.s32 %s19, 1
        // Predicated region
        $region13: #{tpu_custom_call.1} parent=11 // pred_check
          %p280 = pneg %p66
        $region14: #{tpu_custom_call.1} parent=11 // pred_check_branch
          %282 = sbr.rel (%p280) target = $region16
        $region15: #{tpu_custom_call.1} parent=11 // pred_region
          _
        $region16: #{tpu_custom_call.1} parent=11 // pred_fallthru
          _
        // Predicated region
        $region17: #{tpu_custom_call.1} parent=11 // pred_check
          %p283 = pneg %p87
        $region18: #{tpu_custom_call.1} parent=11 // pred_check_branch
          %285 = sbr.rel (%p283) target = $region20
        $region19: #{tpu_custom_call.1} parent=11 // pred_region
          _
        $region20: #{tpu_custom_call.1} parent=11 // pred_fallthru
          _
        // Predicated region
        $region21: #{tpu_custom_call.1} parent=11 // pred_check
          %p286 = pneg %p108
        $region22: #{tpu_custom_call.1} parent=11 // pred_check_branch
          %288 = sbr.rel (%p286) target = $region24
        $region23: #{tpu_custom_call.1} parent=11 // pred_region
          _
        $region24: #{tpu_custom_call.1} parent=11 // pred_fallthru
          _
        // Predicated region
        $region25: #{tpu_custom_call.1} parent=11 // pred_check
          %p289 = pneg %p129
        $region26: #{tpu_custom_call.1} parent=11 // pred_check_branch
          %291 = sbr.rel (%p289) target = $region28
        $region27: #{tpu_custom_call.1} parent=11 // pred_region
          _
        $region28: #{tpu_custom_call.1} parent=11 // pred_fallthru
          _
        // Predicated region
        $region29: #{tpu_custom_call.1} parent=11 // pred_check
          %p292 = pneg %p150
        $region30: #{tpu_custom_call.1} parent=11 // pred_check_branch
          %294 = sbr.rel (%p292) target = $region32
        $region31: #{tpu_custom_call.1} parent=11 // pred_region
          _
        $region32: #{tpu_custom_call.1} parent=11 // pred_fallthru
          _
        // Predicated region
        $region33: #{tpu_custom_call.1} parent=11 // pred_check
          %p295 = pneg %p171
        $region34: #{tpu_custom_call.1} parent=11 // pred_check_branch
          %297 = sbr.rel (%p295) target = $region36
        $region35: #{tpu_custom_call.1} parent=11 // pred_region
          _
        $region36: #{tpu_custom_call.1} parent=11 // pred_fallthru
          _
        // Predicated region
        $region37: #{tpu_custom_call.1} parent=11 // pred_check
          %p298 = pneg %p192
        $region38: #{tpu_custom_call.1} parent=11 // pred_check_branch
          %300 = sbr.rel (%p298) target = $region40
        $region39: #{tpu_custom_call.1} parent=11 // pred_region
          _
        $region40: #{tpu_custom_call.1} parent=11 // pred_fallthru
          _
        // Predicated region
        $region41: #{tpu_custom_call.1} parent=11 // pred_check
          %p301 = pneg %p213
        $region42: #{tpu_custom_call.1} parent=11 // pred_check_branch
          %303 = sbr.rel (%p301) target = $region44
        $region43: #{tpu_custom_call.1} parent=11 // pred_region
          _
        $region44: #{tpu_custom_call.1} parent=11 // pred_fallthru
          _
      $region12: #{tpu_custom_call.1} parent=5 // pred_fallthru
        _
      %p304 = scmp.lt.s32.totalorder %s19, 2
      // Predicated region
      $region45: #{tpu_custom_call.1} parent=5 // pred_check
        %p305 = pneg %p304
      $region46: #{tpu_custom_call.1} parent=5 // pred_check_branch
        %307 = sbr.rel (%p305) target = $region48
      $region47: #{tpu_custom_call.1} parent=5 // pred_region
        // Predicated region
        $region49: #{tpu_custom_call.1} parent=47 // pred_check
          %p308 = pneg %p39
        $region50: #{tpu_custom_call.1} parent=47 // pred_check_branch
          %310 = sbr.rel (%p308) target = $region52
        $region51: #{tpu_custom_call.1} parent=47 // pred_region
          %s311 = smul.u32 16, %s19
          %p312 = scmp.lt.s32.totalorder %s311, 31
          %s313 = scalar_select %p312, %s311, 31
          %s314 = smul.addr %s313, 4
          %s315 = scalar_lea.vmem %s0, %s314
          %s316 = smul.u32 16, %s19
        $region52: #{tpu_custom_call.1} parent=47 // pred_fallthru
          _
        // Predicated region
        $region53: #{tpu_custom_call.1} parent=47 // pred_check
          %p317 = pneg %p233
        $region54: #{tpu_custom_call.1} parent=47 // pred_check_branch
          %319 = sbr.rel (%p317) target = $region56
        $region55: #{tpu_custom_call.1} parent=47 // pred_region
          %p320 = scmp.lt.s32.totalorder %s19, 1
          %s321 = scalar_select %p320, %s19, 1
          %s322 = smul.addr %s321, 2
          %s323 = scalar_lea.vmem %s9, %s322
        $region56: #{tpu_custom_call.1} parent=47 // pred_fallthru
          _
      $region48: #{tpu_custom_call.1} parent=5 // pred_fallthru
        _
      %p324 = scmp.le.s32.totalorder 1, %s19
      %p325 = scmp.lt.s32.totalorder %s19, 3
      %p326 = pnand %p324, %p325
      %p327 = pneg %p326
      // Predicated region
      $region57: #{tpu_custom_call.1} parent=5 // pred_check
        _
      $region58: #{tpu_custom_call.1} parent=5 // pred_check_branch
        %329 = sbr.rel (%p326) target = $region60
      $region59: #{tpu_custom_call.1} parent=5 // pred_region
        %s330 = ssub.s32 %s19, 1
        %s331 = smul.u32 16, %s24
        %p332 = scmp.lt.s32.totalorder %s331, 31
        %s333 = scalar_select %p332, %s331, 31
        %s334 = smul.addr %s333, 4
        %s335 = scalar_lea.vmem %s0, %s334
        %p336 = pneg %p45
        %p337 = pneg %p42
        %p338 = pneg %p66
        %p339 = pneg %p63
        %p340 = pneg %p87
        %p341 = pneg %p84
        %p342 = pneg %p108
        %p343 = pneg %p105
        %p344 = pneg %p129
        %p345 = pneg %p126
        %p346 = pneg %p150
        %p347 = pneg %p147
        %p348 = pneg %p171
        %p349 = pneg %p168
        %p350 = pneg %p192
        %p351 = pneg %p189
        %p352 = pneg %p213
        %p353 = pneg %p210
        %p354 = scmp.lt.s32.totalorder %s24, 1
        %s355 = scalar_select %p354, %s24, 1
        %s356 = smul.addr %s355, 2
        %s357 = scalar_lea.vmem %s9, %s356
        %p358 = pneg %p239
        %p359 = pneg %p236
        %p360 = pneg %p265
        %p361 = pneg %p262
        %s362 = sand.u32 %s252, 1
        %s363 = scalar_lea.sflag [#allocation3], %s362
        %s364 = sand.u32 %s252, 1
        %s365 = smul.addr %s364, 2
        %s366 = scalar_lea.vmem [#allocation2], %s365
        %s367 = smul.u32 16, %s24
        %p368 = scmp.lt.s32.totalorder %s367, 31
        %s369 = scalar_select %p368, %s367, 31
        %s370 = smul.addr %s369, 4
        %s371 = scalar_lea.vmem %s0, %s370
        %s372 = smul.u32 16, %s24
        %p373 = scmp.lt.s32.totalorder %s24, 1
        %s374 = scalar_select %p373, %s24, 1
        %s375 = smul.addr %s374, 2
        %s376 = scalar_lea.vmem %s9, %s375
        %v378 = vld [vmem:[%s371] sm:$0xf]
        %v379 = vld [vmem:[%s371 + $0x4] sm:$0xf]
        %v380 = vld [vmem:[%s371 + $0x8] sm:$0xf]
        %v381 = vld [vmem:[%s371 + $0xc] sm:$0xf]
        %v382 = vld [vmem:[%s371 + $0x10] sm:$0xf]
        %v383 = vld [vmem:[%s371 + $0x14] sm:$0xf]
        %v384 = vld [vmem:[%s371 + $0x18] sm:$0xf]
        %v385 = vld [vmem:[%s371 + $0x1c] sm:$0xf]
        %v386 = vld [vmem:[%s371 + $0x20] sm:$0xf]
        %v387 = vld [vmem:[%s371 + $0x24] sm:$0xf]
        %v388 = vld [vmem:[%s371 + $0x28] sm:$0xf]
        %v389 = vld [vmem:[%s371 + $0x2c] sm:$0xf]
        %v390 = vld [vmem:[%s371 + $0x30] sm:$0xf]
        %v391 = vld [vmem:[%s371 + $0x34] sm:$0xf]
        %v392 = vld [vmem:[%s371 + $0x38] sm:$0xf]
        %v393 = vld [vmem:[%s371 + $0x3c] sm:$0xf]
        %v394 = vld [vmem:[%s1] sm:$0x3]
        %v395 = vld [vmem:[%s2] sm:$0x1]
        %v397 = vperm.slane %v395, 0
        %v415 = vunpack.c.l.b16 %v378
        %v416 = vunpack.c.l.b16 %v379
        %v417 = vunpack.c.l.b16 %v380
        %v418 = vunpack.c.l.b16 %v381
        %v419 = vunpack.c.l.b16 %v382
        %v420 = vunpack.c.l.b16 %v383
        %v421 = vunpack.c.l.b16 %v384
        %v422 = vunpack.c.l.b16 %v385
        %v423 = vunpack.c.l.b16 %v386
        %v424 = vunpack.c.l.b16 %v387
        %v425 = vunpack.c.l.b16 %v388
        %v426 = vunpack.c.l.b16 %v389
        %v427 = vunpack.c.l.b16 %v390
        %v428 = vunpack.c.l.b16 %v391
        %v429 = vunpack.c.l.b16 %v392
        %v430 = vunpack.c.l.b16 %v393
        %v431 = vpack.c.b16 %v416, %v415
        %v432 = vpack.c.b16 %v418, %v417
        %v433 = vpack.c.b16 %v420, %v419
        %v434 = vpack.c.b16 %v422, %v421
        %v435 = vpack.c.b16 %v424, %v423
        %v436 = vpack.c.b16 %v426, %v425
        %v437 = vpack.c.b16 %v428, %v427
        %v438 = vpack.c.b16 %v430, %v429
        %vm439 = vcmask 31744
        %v441 = vsel %vm439, %v431, 0
        %v444 = vsel %vm439, %v432, 0
        %v447 = vsel %vm439, %v433, 0
        %v450 = vsel %vm439, %v434, 0
        %v453 = vsel %vm439, %v435, 0
        %v456 = vsel %vm439, %v436, 0
        %v459 = vsel %vm439, %v437, 0
        %v462 = vsel %vm439, %v438, 0
        %vm464 = vcmask 1041408
        %v466 = vsel %vm464, %v394, 0
        %468 = vmatpush.bf16.msra.mxu0 0
        %469 = vmatpush.bf16.msra.mxu0 0
        %470 = vmatpush.bf16.msra.mxu0 0
        %471 = vmatpush.bf16.msra.mxu0 0
        %472 = vmatpush.bf16.msra.mxu0 0
        %473 = vmatpush.bf16.msra.mxu0 0
        %474 = vmatpush.bf16.msra.mxu0 0
        %475 = vmatpush.bf16.msra.mxu0 %v466
        %476 = vmatmul.bf16.gmra.mxu0 %v441
        %v477 = vpop.f32.mrf.mxu0
        %v478 = vadd.f32 %v397, %v477
        %v479 = vpop.f32.mrf.mxu0
        %v480 = vadd.f32 %v397, %v479
        %481 = vmatmul.bf16.gmra.mxu0 %v444
        %v482 = vpop.f32.mrf.mxu0
        %v483 = vadd.f32 %v397, %v482
        %v484 = vpop.f32.mrf.mxu0
        %v485 = vadd.f32 %v397, %v484
        %486 = vmatmul.bf16.gmra.mxu0 %v447
        %v487 = vpop.f32.mrf.mxu0
        %v488 = vadd.f32 %v397, %v487
        %v489 = vpop.f32.mrf.mxu0
        %v490 = vadd.f32 %v397, %v489
        %491 = vmatmul.bf16.gmra.mxu0 %v450
        %v492 = vpop.f32.mrf.mxu0
        %v493 = vadd.f32 %v397, %v492
        %v494 = vpop.f32.mrf.mxu0
        %v495 = vadd.f32 %v397, %v494
        %496 = vmatmul.bf16.gmra.mxu0 %v453
        %v497 = vpop.f32.mrf.mxu0
        %v498 = vadd.f32 %v397, %v497
        %v499 = vpop.f32.mrf.mxu0
        %v500 = vadd.f32 %v397, %v499
        %501 = vmatmul.bf16.gmra.mxu0 %v456
        %v502 = vpop.f32.mrf.mxu0
        %v503 = vadd.f32 %v397, %v502
        %v504 = vpop.f32.mrf.mxu0
        %v505 = vadd.f32 %v397, %v504
        %506 = vmatmul.bf16.gmra.mxu0 %v459
        %v507 = vpop.f32.mrf.mxu0
        %v508 = vadd.f32 %v397, %v507
        %v509 = vpop.f32.mrf.mxu0
        %v510 = vadd.f32 %v397, %v509
        %511 = vmatmul.bf16.gmra.mxu0 %v462
        %v512 = vpop.f32.mrf.mxu0
        %v513 = vadd.f32 %v397, %v512
        %v514 = vpop.f32.mrf.mxu0
        %v515 = vadd.f32 %v397, %v514
        %516 = vdwg.mxu0
        %v517 = vmax.f32 %v478, 0.0
        %v518 = vmax.f32 %v480, 0.0
        %v519 = vmax.f32 %v483, 0.0
        %v520 = vmax.f32 %v485, 0.0
        %v521 = vmax.f32 %v488, 0.0
        %v522 = vmax.f32 %v490, 0.0
        %v523 = vmax.f32 %v493, 0.0
        %v524 = vmax.f32 %v495, 0.0
        %v525 = vmax.f32 %v498, 0.0
        %v526 = vmax.f32 %v500, 0.0
        %v527 = vmax.f32 %v503, 0.0
        %v528 = vmax.f32 %v505, 0.0
        %v529 = vmax.f32 %v508, 0.0
        %v530 = vmax.f32 %v510, 0.0
        %v531 = vmax.f32 %v513, 0.0
        %v532 = vmax.f32 %v515, 0.0
        %v533 = vpack.c.bf16 %v518, %v517
        %v534 = vpack.c.bf16 %v520, %v519
        %v535 = vpack.c.bf16 %v522, %v521
        %v536 = vpack.c.bf16 %v524, %v523
        %v537 = vpack.c.bf16 %v526, %v525
        %v538 = vpack.c.bf16 %v528, %v527
        %v539 = vpack.c.bf16 %v530, %v529
        %v540 = vpack.c.bf16 %v532, %v531
        %v541 = vld [vmem:[%s3] sm:$0xf]
        %v542 = vld [vmem:[%s3 + $0x4] sm:$0xf]
        %v543 = vld [vmem:[%s3 + $0x8] sm:$0xf]
        %v544 = vld [vmem:[%s3 + $0xc] sm:$0xf]
        %v545 = vld [vmem:[%s4] sm:$0x1]
        %v547 = vperm.slane %v545, 0
        %v553 = vunpack.c.l.b16 %v541
        %v554 = vunpack.c.l.b16 %v542
        %v555 = vunpack.c.l.b16 %v543
        %v556 = vunpack.c.l.b16 %v544
        %v557 = vpack.c.b16 %v554, %v553
        %v558 = vpack.c.b16 %v556, %v555
        %vm561 = vcmask 261120
        %v563 = vsel %vm561, %v533, 0
        %v566 = vsel %vm561, %v534, 0
        %v569 = vsel %vm561, %v535, 0
        %v572 = vsel %vm561, %v536, 0
        %v575 = vsel %vm561, %v537, 0
        %v578 = vsel %vm561, %v538, 0
        %v581 = vsel %vm561, %v539, 0
        %v584 = vsel %vm561, %v540, 0
        %586 = vmatpush.bf16.msra.mxu0 0
        %587 = vmatpush.bf16.msra.mxu0 0
        %588 = vmatpush.bf16.msra.mxu0 0
        %589 = vmatpush.bf16.msra.mxu0 0
        %590 = vmatpush.bf16.msra.mxu0 0
        %591 = vmatpush.bf16.msra.mxu0 0
        %592 = vmatpush.bf16.msra.mxu0 %v558
        %593 = vmatpush.bf16.msra.mxu0 %v557
        %594 = vmatmul.bf16.gmra.mxu0 %v563
        %v595 = vpop.f32.mrf.mxu0
        %v596 = vadd.f32 %v547, %v595
        %v597 = vpop.f32.mrf.mxu0
        %v598 = vadd.f32 %v547, %v597
        %599 = vmatmul.bf16.gmra.mxu0 %v566
        %v600 = vpop.f32.mrf.mxu0
        %v601 = vadd.f32 %v547, %v600
        %v602 = vpop.f32.mrf.mxu0
        %v603 = vadd.f32 %v547, %v602
        %604 = vmatmul.bf16.gmra.mxu0 %v569
        %v605 = vpop.f32.mrf.mxu0
        %v606 = vadd.f32 %v547, %v605
        %v607 = vpop.f32.mrf.mxu0
        %v608 = vadd.f32 %v547, %v607
        %609 = vmatmul.bf16.gmra.mxu0 %v572
        %v610 = vpop.f32.mrf.mxu0
        %v611 = vadd.f32 %v547, %v610
        %v612 = vpop.f32.mrf.mxu0
        %v613 = vadd.f32 %v547, %v612
        %614 = vmatmul.bf16.gmra.mxu0 %v575
        %v615 = vpop.f32.mrf.mxu0
        %v616 = vadd.f32 %v547, %v615
        %v617 = vpop.f32.mrf.mxu0
        %v618 = vadd.f32 %v547, %v617
        %619 = vmatmul.bf16.gmra.mxu0 %v578
        %v620 = vpop.f32.mrf.mxu0
        %v621 = vadd.f32 %v547, %v620
        %v622 = vpop.f32.mrf.mxu0
        %v623 = vadd.f32 %v547, %v622
        %624 = vmatmul.bf16.gmra.mxu0 %v581
        %v625 = vpop.f32.mrf.mxu0
        %v626 = vadd.f32 %v547, %v625
        %v627 = vpop.f32.mrf.mxu0
        %v628 = vadd.f32 %v547, %v627
        %629 = vmatmul.bf16.gmra.mxu0 %v584
        %v630 = vpop.f32.mrf.mxu0
        %v631 = vadd.f32 %v547, %v630
        %v632 = vpop.f32.mrf.mxu0
        %v633 = vadd.f32 %v547, %v632
        %634 = vdwg.mxu0
        %v635 = vmax.f32 %v596, 0.0
        %v636 = vmax.f32 %v598, 0.0
        %v637 = vmax.f32 %v601, 0.0
        %v638 = vmax.f32 %v603, 0.0
        %v639 = vmax.f32 %v606, 0.0
        %v640 = vmax.f32 %v608, 0.0
        %v641 = vmax.f32 %v611, 0.0
        %v642 = vmax.f32 %v613, 0.0
        %v643 = vmax.f32 %v616, 0.0
        %v644 = vmax.f32 %v618, 0.0
        %v645 = vmax.f32 %v621, 0.0
        %v646 = vmax.f32 %v623, 0.0
        %v647 = vmax.f32 %v626, 0.0
        %v648 = vmax.f32 %v628, 0.0
        %v649 = vmax.f32 %v631, 0.0
        %v650 = vmax.f32 %v633, 0.0
        %v651 = vpack.c.bf16 %v636, %v635
        %v652 = vpack.c.bf16 %v638, %v637
        %v653 = vpack.c.bf16 %v640, %v639
        %v654 = vpack.c.bf16 %v642, %v641
        %v655 = vpack.c.bf16 %v644, %v643
        %v656 = vpack.c.bf16 %v646, %v645
        %v657 = vpack.c.bf16 %v648, %v647
        %v658 = vpack.c.bf16 %v650, %v649
        %v659 = vld [vmem:[%s5] sm:$0xff]
        %v660 = vld [vmem:[%s5 + $0x8] sm:$0xff]
        %v661 = vld [vmem:[%s5 + $0x10] sm:$0xff]
        %v662 = vld [vmem:[%s5 + $0x18] sm:$0xff]
        %v663 = vld [vmem:[%s6] sm:$0x3]
        %v665 = vperm.slane %v663, 0
        %v666 = vperm.slane %v663, 1
        %v673 = vunpack.c.l.b16 %v659
        %v674 = vunpack.c.h.b16 %v659
        %v675 = vunpack.c.l.b16 %v660
        %v676 = vunpack.c.h.b16 %v660
        %v677 = vunpack.c.l.b16 %v661
        %v678 = vunpack.c.h.b16 %v661
        %v679 = vunpack.c.l.b16 %v662
        %v680 = vunpack.c.h.b16 %v662
        %v681 = vpack.c.b16 %v675, %v673
        %v682 = vpack.c.b16 %v676, %v674
        %v683 = vpack.c.b16 %v679, %v677
        %v684 = vpack.c.b16 %v680, %v678
        %v690 = vsel %vm561, %v651, 0
        %v693 = vsel %vm561, %v652, 0
        %v696 = vsel %vm561, %v653, 0
        %v699 = vsel %vm561, %v654, 0
        %v702 = vsel %vm561, %v655, 0
        %v705 = vsel %vm561, %v656, 0
        %v708 = vsel %vm561, %v657, 0
        %v711 = vsel %vm561, %v658, 0
        %713 = vmatpush.bf16.msra.mxu0 0
        %714 = vmatpush.bf16.msra.mxu0 0
        %715 = vmatpush.bf16.msra.mxu0 0
        %716 = vmatpush.bf16.msra.mxu0 0
        %717 = vmatpush.bf16.msra.mxu0 0
        %718 = vmatpush.bf16.msra.mxu0 0
        %719 = vmatpush.bf16.msra.mxu0 %v683
        %720 = vmatpush.bf16.msra.mxu0 %v681
        %721 = vmatmul.bf16.gmra.mxu0 %v690
        %v722 = vpop.f32.mrf.mxu0
        %v723 = vadd.f32 %v665, %v722
        %v724 = vpop.f32.mrf.mxu0
        %v725 = vadd.f32 %v665, %v724
        %726 = vmatmul.bf16.gmra.mxu0 %v693
        %v727 = vpop.f32.mrf.mxu0
        %v728 = vadd.f32 %v665, %v727
        %v729 = vpop.f32.mrf.mxu0
        %v730 = vadd.f32 %v665, %v729
        %731 = vmatmul.bf16.gmra.mxu0 %v696
        %v732 = vpop.f32.mrf.mxu0
        %v733 = vadd.f32 %v665, %v732
        %v734 = vpop.f32.mrf.mxu0
        %v735 = vadd.f32 %v665, %v734
        %736 = vmatmul.bf16.gmra.mxu0 %v699
        %v737 = vpop.f32.mrf.mxu0
        %v738 = vadd.f32 %v665, %v737
        %v739 = vpop.f32.mrf.mxu0
        %v740 = vadd.f32 %v665, %v739
        %741 = vmatmul.bf16.gmra.mxu0 %v702
        %v742 = vpop.f32.mrf.mxu0
        %v743 = vadd.f32 %v665, %v742
        %v744 = vpop.f32.mrf.mxu0
        %v745 = vadd.f32 %v665, %v744
        %746 = vmatmul.bf16.gmra.mxu0 %v705
        %v747 = vpop.f32.mrf.mxu0
        %v748 = vadd.f32 %v665, %v747
        %v749 = vpop.f32.mrf.mxu0
        %v750 = vadd.f32 %v665, %v749
        %751 = vmatmul.bf16.gmra.mxu0 %v708
        %v752 = vpop.f32.mrf.mxu0
        %v753 = vadd.f32 %v665, %v752
        %v754 = vpop.f32.mrf.mxu0
        %v755 = vadd.f32 %v665, %v754
        %756 = vmatmul.bf16.gmra.mxu0 %v711
        %v757 = vpop.f32.mrf.mxu0
        %v758 = vadd.f32 %v665, %v757
        %v759 = vpop.f32.mrf.mxu0
        %v760 = vadd.f32 %v665, %v759
        %761 = vdwg.mxu0
        %762 = vmatpush.bf16.msra.mxu0 0
        %763 = vmatpush.bf16.msra.mxu0 0
        %764 = vmatpush.bf16.msra.mxu0 0
        %765 = vmatpush.bf16.msra.mxu0 0
        %766 = vmatpush.bf16.msra.mxu0 0
        %767 = vmatpush.bf16.msra.mxu0 0
        %768 = vmatpush.bf16.msra.mxu0 %v684
        %769 = vmatpush.bf16.msra.mxu0 %v682
        %770 = vmatmul.bf16.gmra.mxu0 %v690
        %v771 = vpop.f32.mrf.mxu0
        %v772 = vadd.f32 %v666, %v771
        %v773 = vpop.f32.mrf.mxu0
        %v774 = vadd.f32 %v666, %v773
        %775 = vmatmul.bf16.gmra.mxu0 %v693
        %v776 = vpop.f32.mrf.mxu0
        %v777 = vadd.f32 %v666, %v776
        %v778 = vpop.f32.mrf.mxu0
        %v779 = vadd.f32 %v666, %v778
        %780 = vmatmul.bf16.gmra.mxu0 %v696
        %v781 = vpop.f32.mrf.mxu0
        %v782 = vadd.f32 %v666, %v781
        %v783 = vpop.f32.mrf.mxu0
        %v784 = vadd.f32 %v666, %v783
        %785 = vmatmul.bf16.gmra.mxu0 %v699
        %v786 = vpop.f32.mrf.mxu0
        %v787 = vadd.f32 %v666, %v786
        %v788 = vpop.f32.mrf.mxu0
        %v789 = vadd.f32 %v666, %v788
        %790 = vmatmul.bf16.gmra.mxu0 %v702
        %v791 = vpop.f32.mrf.mxu0
        %v792 = vadd.f32 %v666, %v791
        %v793 = vpop.f32.mrf.mxu0
        %v794 = vadd.f32 %v666, %v793
        %795 = vmatmul.bf16.gmra.mxu0 %v705
        %v796 = vpop.f32.mrf.mxu0
        %v797 = vadd.f32 %v666, %v796
        %v798 = vpop.f32.mrf.mxu0
        %v799 = vadd.f32 %v666, %v798
        %800 = vmatmul.bf16.gmra.mxu0 %v708
        %v801 = vpop.f32.mrf.mxu0
        %v802 = vadd.f32 %v666, %v801
        %v803 = vpop.f32.mrf.mxu0
        %v804 = vadd.f32 %v666, %v803
        %805 = vmatmul.bf16.gmra.mxu0 %v711
        %v806 = vpop.f32.mrf.mxu0
        %v807 = vadd.f32 %v666, %v806
        %v808 = vpop.f32.mrf.mxu0
        %v809 = vadd.f32 %v666, %v808
        %810 = vdwg.mxu0
        %v811 = vld [vmem:[%s7] sm:$0xff]
        %v812 = vld [vmem:[%s8] sm:$0xff]
        %v813 = vld [vmem:[%s8 + $0x8] sm:$0xff]
        %v814 = vld [vmem:[%s8 + $0x10] sm:$0xff]
        %v815 = vld [vmem:[%s8 + $0x18] sm:$0xff]
        %v816 = vld [vmem:[%s8 + $0x20] sm:$0xff]
        %v817 = vld [vmem:[%s8 + $0x28] sm:$0xff]
        %v818 = vld [vmem:[%s8 + $0x30] sm:$0xff]
        %v819 = vld [vmem:[%s8 + $0x38] sm:$0xff]
        %v820 = vld [vmem:[%s8 + $0x40] sm:$0xff]
        %v821 = vld [vmem:[%s8 + $0x48] sm:$0xff]
        %v822 = vld [vmem:[%s8 + $0x50] sm:$0xff]
        %v823 = vld [vmem:[%s8 + $0x58] sm:$0xff]
        %v824 = vld [vmem:[%s8 + $0x60] sm:$0xff]
        %v825 = vld [vmem:[%s8 + $0x68] sm:$0xff]
        %v826 = vld [vmem:[%s8 + $0x70] sm:$0xff]
        %v827 = vld [vmem:[%s8 + $0x78] sm:$0xff]
        %v828 = vld [vmem:[%s8 + $0x80] sm:$0xff]
        %v829 = vld [vmem:[%s8 + $0x88] sm:$0xff]
        %v830 = vld [vmem:[%s8 + $0x90] sm:$0xff]
        %v831 = vld [vmem:[%s8 + $0x98] sm:$0xff]
        %v832 = vld [vmem:[%s8 + $0xa0] sm:$0xff]
        %v833 = vld [vmem:[%s8 + $0xa8] sm:$0xff]
        %v834 = vld [vmem:[%s8 + $0xb0] sm:$0xff]
        %v835 = vld [vmem:[%s8 + $0xb8] sm:$0xff]
        %v836 = vld [vmem:[%s8 + $0xc0] sm:$0xff]
        %v837 = vld [vmem:[%s8 + $0xc8] sm:$0xff]
        %v838 = vld [vmem:[%s8 + $0xd0] sm:$0xff]
        %v839 = vld [vmem:[%s8 + $0xd8] sm:$0xff]
        %v840 = vld [vmem:[%s8 + $0xe0] sm:$0xff]
        %v841 = vld [vmem:[%s8 + $0xe8] sm:$0xff]
        %v842 = vld [vmem:[%s8 + $0xf0] sm:$0xff]
        %v843 = vld [vmem:[%s8 + $0xf8] sm:$0xff]
        %v844 = vld [vmem:[%s376] sm:$0x3]
        %v845 = vmax.f32 %v723, %v728
        %v846 = vmax.f32 %v725, %v730
        %v847 = vmax.f32 %v845, %v733
        %v848 = vmax.f32 %v846, %v735
        %v849 = vmax.f32 %v847, %v738
        %v850 = vmax.f32 %v848, %v740
        %v851 = vmax.f32 %v849, %v850
        %v852 = vrot.slane %v851, 4
        %v853 = vmax.f32 %v851, %v852
        %v854 = vrot.slane %v853, 2
        %v855 = vmax.f32 %v853, %v854
        %v856 = vrot.slane %v855, 1
        %v857 = vmax.f32 %v855, %v856
        %v858 = vmax.f32 %v772, %v777
        %v859 = vmax.f32 %v774, %v779
        %v860 = vmax.f32 %v858, %v782
        %v861 = vmax.f32 %v859, %v784
        %v862 = vmax.f32 %v860, %v787
        %v863 = vmax.f32 %v861, %v789
        %v864 = vmax.f32 %v862, %v863
        %v865 = vrot.slane %v864, 4
        %v866 = vmax.f32 %v864, %v865
        %v867 = vrot.slane %v866, 2
        %v868 = vmax.f32 %v866, %v867
        %v869 = vrot.slane %v868, 1
        %v870 = vmax.f32 %v868, %v869
        %872 = vrot.lane.b32.xlu0 %v857, 96
        %v873 = vpop.permute.xlu0 %872
        %v875 = vmax.f32 %v857, %v873
        %876 = vrot.lane.b32.xlu0 %v857, 64
        %v877 = vpop.permute.xlu0 %876
        %v879 = vmax.f32 %v875, %v877
        %880 = vrot.lane.b32.xlu0 %v857, 32
        %v881 = vpop.permute.xlu0 %880
        %v883 = vmax.f32 %v879, %v881
        %v884 = vmax.f32 %v883, %v870
        %886 = vrot.lane.b32.xlu0 %v870, 96
        %v887 = vpop.permute.xlu0 %886
        %v889 = vmax.f32 %v884, %v887
        %890 = vrot.lane.b32.xlu0 %v870, 64
        %v891 = vpop.permute.xlu0 %890
        %v893 = vmax.f32 %v889, %v891
        %894 = vrot.lane.b32.xlu0 %v870, 32
        %v895 = vpop.permute.xlu0 %894
        %v897 = vmax.f32 %v893, %v895
        %899 = vrot.lane.b32.xlu0 %v897, 32
        %v900 = vpop.permute.xlu0 %899
        %902 = vrot.lane.b32.xlu0 %v897, 64
        %v903 = vpop.permute.xlu0 %902
        %905 = vrot.lane.b32.xlu0 %v897, 96
        %v906 = vpop.permute.xlu0 %905
        %v908 = vsel %vm561, %v897, %v900
        %vm909 = vcmask 523264
        %v910 = vsel %vm909, %v908, %v903
        %vm911 = vcmask 785408
        %v912 = vsel %vm911, %v910, %v906
        %v913 = vperm.slane %v912, 0
        %v914 = vsub.f32 %v723, %v913
        %v915 = vsub.f32 %v772, %v913
        %v916 = vsub.f32 %v725, %v913
        %v917 = vsub.f32 %v774, %v913
        %v918 = vsub.f32 %v728, %v913
        %v919 = vsub.f32 %v777, %v913
        %v920 = vsub.f32 %v730, %v913
        %v921 = vsub.f32 %v779, %v913
        %v922 = vsub.f32 %v733, %v913
        %v923 = vsub.f32 %v782, %v913
        %v924 = vsub.f32 %v735, %v913
        %v925 = vsub.f32 %v784, %v913
        %v926 = vsub.f32 %v738, %v913
        %v927 = vsub.f32 %v787, %v913
        %v928 = vsub.f32 %v740, %v913
        %v929 = vsub.f32 %v789, %v913
        %v930 = vmul.f32 %v914, 1.442695
        %v931 = vpow.pop %v930
        %v932 = vmul.f32 %v915, 1.442695
        %v933 = vpow.pop %v932
        %v934 = vmul.f32 %v916, 1.442695
        %v935 = vpow.pop %v934
        %v936 = vmul.f32 %v917, 1.442695
        %v937 = vpow.pop %v936
        %v938 = vmul.f32 %v918, 1.442695
        %v939 = vpow.pop %v938
        %v940 = vmul.f32 %v919, 1.442695
        %v941 = vpow.pop %v940
        %v942 = vmul.f32 %v920, 1.442695
        %v943 = vpow.pop %v942
        %v944 = vmul.f32 %v921, 1.442695
        %v945 = vpow.pop %v944
        %v946 = vmul.f32 %v922, 1.442695
        %v947 = vpow.pop %v946
        %v948 = vmul.f32 %v923, 1.442695
        %v949 = vpow.pop %v948
        %v950 = vmul.f32 %v924, 1.442695
        %v951 = vpow.pop %v950
        %v952 = vmul.f32 %v925, 1.442695
        %v953 = vpow.pop %v952
        %v954 = vmul.f32 %v926, 1.442695
        %v955 = vpow.pop %v954
        %v956 = vmul.f32 %v927, 1.442695
        %v957 = vpow.pop %v956
        %v958 = vmul.f32 %v928, 1.442695
        %v959 = vpow.pop %v958
        %v960 = vmul.f32 %v929, 1.442695
        %v961 = vpow.pop %v960
        %v963 = vsel %vm909, %v811, 0
        %965 = vmatpush.msra.mxu0 0.0
        %966 = vmatpush.msra.mxu0 0.0
        %967 = vmatpush.msra.mxu0 0.0
        %968 = vmatpush.msra.mxu0 0.0
        %969 = vmatpush.msra.mxu0 0.0
        %970 = vmatpush.msra.mxu0 0.0
        %971 = vmatpush.msra.mxu0 0.0
        %972 = vmatpush.msra.mxu0 0.0
        %973 = vmatpush.msra.mxu0 %v959
        %974 = vmatpush.msra.mxu0 %v955
        %975 = vmatpush.msra.mxu0 %v951
        %976 = vmatpush.msra.mxu0 %v947
        %977 = vmatpush.msra.mxu0 %v943
        %978 = vmatpush.msra.mxu0 %v939
        %979 = vmatpush.msra.mxu0 %v935
        %980 = vmatpush.msra.mxu0 %v931
        %981 = vmatmul.f32.gmra.mxu0 %v963
        %v982 = vpop.f32.mrf.mxu0
        %v983 = vadd.f32 0.0, %v982
        %984 = vdwg.mxu0
        %985 = vmatpush.msra.mxu0 0.0
        %986 = vmatpush.msra.mxu0 0.0
        %987 = vmatpush.msra.mxu0 0.0
        %988 = vmatpush.msra.mxu0 0.0
        %989 = vmatpush.msra.mxu0 0.0
        %990 = vmatpush.msra.mxu0 0.0
        %991 = vmatpush.msra.mxu0 0.0
        %992 = vmatpush.msra.mxu0 0.0
        %993 = vmatpush.msra.mxu0 %v961
        %994 = vmatpush.msra.mxu0 %v957
        %995 = vmatpush.msra.mxu0 %v953
        %996 = vmatpush.msra.mxu0 %v949
        %997 = vmatpush.msra.mxu0 %v945
        %998 = vmatpush.msra.mxu0 %v941
        %999 = vmatpush.msra.mxu0 %v937
        %1000 = vmatpush.msra.mxu0 %v933
        %1001 = vmatmul.f32.gmra.mxu0 %v963
        %v1002 = vpop.f32.mrf.mxu0
        %v1003 = vadd.f32 0.0, %v1002
        %1004 = vdwg.mxu0
        %1005 = vmatpush.msra.mxu0 %v827
        %1006 = vmatpush.msra.mxu0 %v826
        %1007 = vmatpush.msra.mxu0 %v825
        %1008 = vmatpush.msra.mxu0 %v824
        %1009 = vmatpush.msra.mxu0 %v823
        %1010 = vmatpush.msra.mxu0 %v822
        %1011 = vmatpush.msra.mxu0 %v821
        %1012 = vmatpush.msra.mxu0 %v820
        %1013 = vmatpush.msra.mxu0 %v819
        %1014 = vmatpush.msra.mxu0 %v818
        %1015 = vmatpush.msra.mxu0 %v817
        %1016 = vmatpush.msra.mxu0 %v816
        %1017 = vmatpush.msra.mxu0 %v815
        %1018 = vmatpush.msra.mxu0 %v814
        %1019 = vmatpush.msra.mxu0 %v813
        %1020 = vmatpush.msra.mxu0 %v812
        %1021 = vmatmul.f32.gmra.mxu0 %v983
        %v1022 = vpop.f32.mrf.mxu0
        %v1023 = vadd.f32 0.0, %v1022
        %1024 = vdwg.mxu0
        %1025 = vmatpush.msra.mxu0 %v843
        %1026 = vmatpush.msra.mxu0 %v842
        %1027 = vmatpush.msra.mxu0 %v841
        %1028 = vmatpush.msra.mxu0 %v840
        %1029 = vmatpush.msra.mxu0 %v839
        %1030 = vmatpush.msra.mxu0 %v838
        %1031 = vmatpush.msra.mxu0 %v837
        %1032 = vmatpush.msra.mxu0 %v836
        %1033 = vmatpush.msra.mxu0 %v835
        %1034 = vmatpush.msra.mxu0 %v834
        %1035 = vmatpush.msra.mxu0 %v833
        %1036 = vmatpush.msra.mxu0 %v832
        %1037 = vmatpush.msra.mxu0 %v831
        %1038 = vmatpush.msra.mxu0 %v830
        %1039 = vmatpush.msra.mxu0 %v829
        %1040 = vmatpush.msra.mxu0 %v828
        %1041 = vmatmul.f32.gmra.mxu0 %v1003
        %v1042 = vpop.f32.mrf.mxu0
        %v1043 = vadd.f32 %v1023, %v1042
        %1044 = vdwg.mxu0
        %v1045 = vrcp.pop %v1043
        %v1046 = vmul.f32 %v1043, %v1045
        %v1047 = vsub.f32 1.0, %v1046
        %v1048 = vmul.f32 %v1045, %v1047
        %v1049 = vadd.f32 %v1045, %v1048
        %vm1050 = vweird.f32 %v1043
        %vm1051 = vweird.f32 %v1045
        %vm1052 = vmor %vm1050, %vm1051
        %v1053 = vsel %vm1052, %v1045, %v1049
        %v1054 = vand.u32 2147483647, %v1043
        %vm1055 = vcmp.eq.f32.partialorder %v1054, 8.507059e+37
        %v1056 = vand.u32 %v1043, 2147483648
        %v1057 = vor.u32 1.1754944e-38, %v1056
        %v1058 = vsel %vm1055, %v1057, %v1053
        %v1060 = vrot.slane %v1058, 7
        %v1062 = vmul.f32 %v1043, %v1060
        %v1063 = vrot.slane %v1058, 6
        %v1065 = vmul.f32 %v1043, %v1063
        %1066 = vrot.lane.b32.xlu0 %v1058, 32
        %v1067 = vpop.permute.xlu0 %1066
        %v1069 = vmul.f32 %v1043, %v1067
        %v1070 = vmul.f32 %v1069, 0.25
        %v1071 = vsub.f32 %v1070, 1.0
        %v1072 = vmul.f32 %v1071, 0.2
        %1074 = vset.pattern.permute.xlu0 4
        %1075 = vperm.xlu0 %1074, %v844
        %v1076 = vpop.permute.xlu0 %1075
        %v1078 = vadd.f32 %v1072, %v1076
        %v1079 = vmul.f32 %v1062, 8.0
        %1080 = vset.pattern.permute.xlu0 2
        %1081 = vperm.xlu0 %1080, %v844
        %v1082 = vpop.permute.xlu0 %1081
        %v1083 = vrot.slane %v1082, 7
        %v1085 = vsub.f32 %v1079, %v1083
        %1086 = vset.pattern.permute.xlu0 0
        %1087 = vperm.xlu0 %1086, %v844
        %v1088 = vpop.permute.xlu0 %1087
        %v1089 = vrot.slane %v1088, 7
        %v1091 = vmul.f32 %v1085, %v1089
        %v1093 = vrot.slane %v1078, 7
        %1094 = vrot.lane.b32.xlu0 %v1093, 96
        %v1095 = vpop.permute.xlu0 %1094
        %v1097 = vmul.f32 %v1091, %v1095
        %v1098 = vmul.f32 %v1065, 8.0
        %1099 = vset.pattern.permute.xlu0 3
        %1100 = vperm.xlu0 %1099, %v844
        %v1101 = vpop.permute.xlu0 %1100
        %v1102 = vrot.slane %v1101, 6
        %v1104 = vsub.f32 %v1098, %v1102
        %1105 = vset.pattern.permute.xlu0 1
        %1106 = vperm.xlu0 %1105, %v844
        %v1107 = vpop.permute.xlu0 %1106
        %v1108 = vrot.slane %v1107, 6
        %v1110 = vmul.f32 %v1104, %v1108
        %v1111 = vrot.slane %v1078, 6
        %1112 = vrot.lane.b32.xlu0 %v1111, 96
        %v1113 = vpop.permute.xlu0 %1112
        %v1115 = vmul.f32 %v1110, %v1113
        %v1117 = vrot.slane %v1115, 1
        %1118 = vrot.lane.b32.xlu0 %v1117, 32
        %v1119 = vpop.permute.xlu0 %1118
        %1121 = vrot.lane.b32.xlu0 %v1093, 32
        %v1122 = vpop.permute.xlu0 %1121
        %1124 = vrot.lane.b32.xlu0 %v1060, 96
        %v1125 = vpop.permute.xlu0 %1124
        %v1127 = vsel %vm561, %v1097, %v1119
        %v1128 = vsel %vm909, %v1127, %v1122
        %v1129 = vsel %vm911, %v1128, %v1125
        %v1130 = vmax.f32 %v743, %v748
        %v1131 = vmax.f32 %v745, %v750
        %v1132 = vmax.f32 %v1130, %v753
        %v1133 = vmax.f32 %v1131, %v755
        %v1134 = vmax.f32 %v1132, %v758
        %v1135 = vmax.f32 %v1133, %v760
        %v1136 = vmax.f32 %v1134, %v1135
        %v1137 = vrot.slane %v1136, 4
        %v1138 = vmax.f32 %v1136, %v1137
        %v1139 = vrot.slane %v1138, 2
        %v1140 = vmax.f32 %v1138, %v1139
        %v1141 = vrot.slane %v1140, 1
        %v1142 = vmax.f32 %v1140, %v1141
        %v1143 = vmax.f32 %v792, %v797
        %v1144 = vmax.f32 %v794, %v799
        %v1145 = vmax.f32 %v1143, %v802
        %v1146 = vmax.f32 %v1144, %v804
        %v1147 = vmax.f32 %v1145, %v807
        %v1148 = vmax.f32 %v1146, %v809
        %v1149 = vmax.f32 %v1147, %v1148
        %v1150 = vrot.slane %v1149, 4
        %v1151 = vmax.f32 %v1149, %v1150
        %v1152 = vrot.slane %v1151, 2
        %v1153 = vmax.f32 %v1151, %v1152
        %v1154 = vrot.slane %v1153, 1
        %v1155 = vmax.f32 %v1153, %v1154
        %1157 = vrot.lane.b32.xlu0 %v1142, 96
        %v1158 = vpop.permute.xlu0 %1157
        %v1160 = vmax.f32 %v1142, %v1158
        %1161 = vrot.lane.b32.xlu0 %v1142, 64
        %v1162 = vpop.permute.xlu0 %1161
        %v1164 = vmax.f32 %v1160, %v1162
        %1165 = vrot.lane.b32.xlu0 %v1142, 32
        %v1166 = vpop.permute.xlu0 %1165
        %v1168 = vmax.f32 %v1164, %v1166
        %v1169 = vmax.f32 %v1168, %v1155
        %1171 = vrot.lane.b32.xlu0 %v1155, 96
        %v1172 = vpop.permute.xlu0 %1171
        %v1174 = vmax.f32 %v1169, %v1172
        %1175 = vrot.lane.b32.xlu0 %v1155, 64
        %v1176 = vpop.permute.xlu0 %1175
        %v1178 = vmax.f32 %v1174, %v1176
        %1179 = vrot.lane.b32.xlu0 %v1155, 32
        %v1180 = vpop.permute.xlu0 %1179
        %v1182 = vmax.f32 %v1178, %v1180
        %1184 = vrot.lane.b32.xlu0 %v1182, 32
        %v1185 = vpop.permute.xlu0 %1184
        %1187 = vrot.lane.b32.xlu0 %v1182, 64
        %v1188 = vpop.permute.xlu0 %1187
        %1190 = vrot.lane.b32.xlu0 %v1182, 96
        %v1191 = vpop.permute.xlu0 %1190
        %v1193 = vsel %vm561, %v1182, %v1185
        %v1194 = vsel %vm909, %v1193, %v1188
        %v1195 = vsel %vm911, %v1194, %v1191
        %v1196 = vperm.slane %v1195, 0
        %v1197 = vsub.f32 %v743, %v1196
        %v1198 = vsub.f32 %v792, %v1196
        %v1199 = vsub.f32 %v745, %v1196
        %v1200 = vsub.f32 %v794, %v1196
        %v1201 = vsub.f32 %v748, %v1196
        %v1202 = vsub.f32 %v797, %v1196
        %v1203 = vsub.f32 %v750, %v1196
        %v1204 = vsub.f32 %v799, %v1196
        %v1205 = vsub.f32 %v753, %v1196
        %v1206 = vsub.f32 %v802, %v1196
        %v1207 = vsub.f32 %v755, %v1196
        %v1208 = vsub.f32 %v804, %v1196
        %v1209 = vsub.f32 %v758, %v1196
        %v1210 = vsub.f32 %v807, %v1196
        %v1211 = vsub.f32 %v760, %v1196
        %v1212 = vsub.f32 %v809, %v1196
        %v1213 = vmul.f32 %v1197, 1.442695
        %v1214 = vpow.pop %v1213
        %v1215 = vmul.f32 %v1198, 1.442695
        %v1216 = vpow.pop %v1215
        %v1217 = vmul.f32 %v1199, 1.442695
        %v1218 = vpow.pop %v1217
        %v1219 = vmul.f32 %v1200, 1.442695
        %v1220 = vpow.pop %v1219
        %v1221 = vmul.f32 %v1201, 1.442695
        %v1222 = vpow.pop %v1221
        %v1223 = vmul.f32 %v1202, 1.442695
        %v1224 = vpow.pop %v1223
        %v1225 = vmul.f32 %v1203, 1.442695
        %v1226 = vpow.pop %v1225
        %v1227 = vmul.f32 %v1204, 1.442695
        %v1228 = vpow.pop %v1227
        %v1229 = vmul.f32 %v1205, 1.442695
        %v1230 = vpow.pop %v1229
        %v1231 = vmul.f32 %v1206, 1.442695
        %v1232 = vpow.pop %v1231
        %v1233 = vmul.f32 %v1207, 1.442695
        %v1234 = vpow.pop %v1233
        %v1235 = vmul.f32 %v1208, 1.442695
        %v1236 = vpow.pop %v1235
        %v1237 = vmul.f32 %v1209, 1.442695
        %v1238 = vpow.pop %v1237
        %v1239 = vmul.f32 %v1210, 1.442695
        %v1240 = vpow.pop %v1239
        %v1241 = vmul.f32 %v1211, 1.442695
        %v1242 = vpow.pop %v1241
        %v1243 = vmul.f32 %v1212, 1.442695
        %v1244 = vpow.pop %v1243
        %1245 = vmatpush.msra.mxu0 0.0
        %1246 = vmatpush.msra.mxu0 0.0
        %1247 = vmatpush.msra.mxu0 0.0
        %1248 = vmatpush.msra.mxu0 0.0
        %1249 = vmatpush.msra.mxu0 0.0
        %1250 = vmatpush.msra.mxu0 0.0
        %1251 = vmatpush.msra.mxu0 0.0
        %1252 = vmatpush.msra.mxu0 0.0
        %1253 = vmatpush.msra.mxu0 %v1242
        %1254 = vmatpush.msra.mxu0 %v1238
        %1255 = vmatpush.msra.mxu0 %v1234
        %1256 = vmatpush.msra.mxu0 %v1230
        %1257 = vmatpush.msra.mxu0 %v1226
        %1258 = vmatpush.msra.mxu0 %v1222
        %1259 = vmatpush.msra.mxu0 %v1218
        %1260 = vmatpush.msra.mxu0 %v1214
        %1261 = vmatmul.f32.gmra.mxu0 %v963
        %v1262 = vpop.f32.mrf.mxu0
        %v1263 = vadd.f32 0.0, %v1262
        %1264 = vdwg.mxu0
        %1265 = vmatpush.msra.mxu0 0.0
        %1266 = vmatpush.msra.mxu0 0.0
        %1267 = vmatpush.msra.mxu0 0.0
        %1268 = vmatpush.msra.mxu0 0.0
        %1269 = vmatpush.msra.mxu0 0.0
        %1270 = vmatpush.msra.mxu0 0.0
        %1271 = vmatpush.msra.mxu0 0.0
        %1272 = vmatpush.msra.mxu0 0.0
        %1273 = vmatpush.msra.mxu0 %v1244
        %1274 = vmatpush.msra.mxu0 %v1240
        %1275 = vmatpush.msra.mxu0 %v1236
        %1276 = vmatpush.msra.mxu0 %v1232
        %1277 = vmatpush.msra.mxu0 %v1228
        %1278 = vmatpush.msra.mxu0 %v1224
        %1279 = vmatpush.msra.mxu0 %v1220
        %1280 = vmatpush.msra.mxu0 %v1216
        %1281 = vmatmul.f32.gmra.mxu0 %v963
        %v1282 = vpop.f32.mrf.mxu0
        %v1283 = vadd.f32 0.0, %v1282
        %1284 = vdwg.mxu0
        %1285 = vmatpush.msra.mxu0 %v827
        %1286 = vmatpush.msra.mxu0 %v826
        %1287 = vmatpush.msra.mxu0 %v825
        %1288 = vmatpush.msra.mxu0 %v824
        %1289 = vmatpush.msra.mxu0 %v823
        %1290 = vmatpush.msra.mxu0 %v822
        %1291 = vmatpush.msra.mxu0 %v821
        %1292 = vmatpush.msra.mxu0 %v820
        %1293 = vmatpush.msra.mxu0 %v819
        %1294 = vmatpush.msra.mxu0 %v818
        %1295 = vmatpush.msra.mxu0 %v817
        %1296 = vmatpush.msra.mxu0 %v816
        %1297 = vmatpush.msra.mxu0 %v815
        %1298 = vmatpush.msra.mxu0 %v814
        %1299 = vmatpush.msra.mxu0 %v813
        %1300 = vmatpush.msra.mxu0 %v812
        %1301 = vmatmul.f32.gmra.mxu0 %v1263
        %v1302 = vpop.f32.mrf.mxu0
        %v1303 = vadd.f32 0.0, %v1302
        %1304 = vdwg.mxu0
        %1305 = vmatpush.msra.mxu0 %v843
        %1306 = vmatpush.msra.mxu0 %v842
        %1307 = vmatpush.msra.mxu0 %v841
        %1308 = vmatpush.msra.mxu0 %v840
        %1309 = vmatpush.msra.mxu0 %v839
        %1310 = vmatpush.msra.mxu0 %v838
        %1311 = vmatpush.msra.mxu0 %v837
        %1312 = vmatpush.msra.mxu0 %v836
        %1313 = vmatpush.msra.mxu0 %v835
        %1314 = vmatpush.msra.mxu0 %v834
        %1315 = vmatpush.msra.mxu0 %v833
        %1316 = vmatpush.msra.mxu0 %v832
        %1317 = vmatpush.msra.mxu0 %v831
        %1318 = vmatpush.msra.mxu0 %v830
        %1319 = vmatpush.msra.mxu0 %v829
        %1320 = vmatpush.msra.mxu0 %v828
        %1321 = vmatmul.f32.gmra.mxu0 %v1283
        %v1322 = vpop.f32.mrf.mxu0
        %v1323 = vadd.f32 %v1303, %v1322
        %1324 = vdwg.mxu0
        %v1325 = vrcp.pop %v1323
        %v1326 = vmul.f32 %v1323, %v1325
        %v1327 = vsub.f32 1.0, %v1326
        %v1328 = vmul.f32 %v1325, %v1327
        %v1329 = vadd.f32 %v1325, %v1328
        %vm1330 = vweird.f32 %v1323
        %vm1331 = vweird.f32 %v1325
        %vm1332 = vmor %vm1330, %vm1331
        %v1333 = vsel %vm1332, %v1325, %v1329
        %v1334 = vand.u32 2147483647, %v1323
        %vm1335 = vcmp.eq.f32.partialorder %v1334, 8.507059e+37
        %v1336 = vand.u32 %v1323, 2147483648
        %v1337 = vor.u32 1.1754944e-38, %v1336
        %v1338 = vsel %vm1335, %v1337, %v1333
        %v1340 = vrot.slane %v1338, 7
        %v1342 = vmul.f32 %v1323, %v1340
        %v1343 = vrot.slane %v1338, 6
        %v1345 = vmul.f32 %v1323, %v1343
        %1346 = vrot.lane.b32.xlu0 %v1338, 32
        %v1347 = vpop.permute.xlu0 %1346
        %v1349 = vmul.f32 %v1323, %v1347
        %v1350 = vmul.f32 %v1349, 0.25
        %v1351 = vsub.f32 %v1350, 1.0
        %v1352 = vmul.f32 %v1351, 0.2
        %v1353 = vrot.slane %v1076, 1
        %v1355 = vadd.f32 %v1352, %v1353
        %v1356 = vmul.f32 %v1342, 8.0
        %v1358 = vsub.f32 %v1356, %v1082
        %v1360 = vmul.f32 %v1358, %v1088
        %v1362 = vrot.slane %v1355, 7
        %1363 = vrot.lane.b32.xlu0 %v1362, 96
        %v1364 = vpop.permute.xlu0 %1363
        %v1366 = vmul.f32 %v1360, %v1364
        %v1367 = vmul.f32 %v1345, 8.0
        %v1368 = vrot.slane %v1101, 7
        %v1370 = vsub.f32 %v1367, %v1368
        %v1371 = vrot.slane %v1107, 7
        %v1373 = vmul.f32 %v1370, %v1371
        %v1374 = vrot.slane %v1355, 6
        %1375 = vrot.lane.b32.xlu0 %v1374, 96
        %v1376 = vpop.permute.xlu0 %1375
        %v1378 = vmul.f32 %v1373, %v1376
        %v1380 = vrot.slane %v1378, 1
        %1381 = vrot.lane.b32.xlu0 %v1380, 32
        %v1382 = vpop.permute.xlu0 %1381
        %1384 = vrot.lane.b32.xlu0 %v1362, 32
        %v1385 = vpop.permute.xlu0 %1384
        %1387 = vrot.lane.b32.xlu0 %v1340, 96
        %v1388 = vpop.permute.xlu0 %1387
        %v1390 = vsel %vm561, %v1366, %v1382
        %v1391 = vsel %vm909, %v1390, %v1385
        %v1392 = vsel %vm911, %v1391, %v1388
        %v1394 = vrot.slane %v1129, 1
        %vm1396 = vcmask 1040384
        %v1397 = vsel %vm1396, %v1394, %v1392
        %1398 = vst [vmem:[%s366] sm:$0x3] %v1397
        %s1399 = sand.u32 %s252, 1
        %s1400 = scalar_lea.sflag [#allocation3], %s1399
        %s1401 = sand.u32 %s252, 1
        %s1402 = smul.addr %s1401, 2
        %s1403 = scalar_lea.vmem [#allocation2], %s1402
        // Predicated region
        $region61: #{tpu_custom_call.1} parent=59 // pred_check
          %p1404 = pneg %p262
        $region62: #{tpu_custom_call.1} parent=59 // pred_check_branch
          %1406 = sbr.rel (%p1404) target = $region64
        $region63: #{tpu_custom_call.1} parent=59 // pred_region
          %1408 = vsyncadd %s1400, 0
          %s1409 = smul.addr %s24, 2
          %s1410 = scalar_lea.hbm %s10, %s1409
          %s1412 = sshll.u32 %s1403, 4
          %s1413 = int_to_ptr.vmem [resolvable:$true] %s1412
          %s1414 = sshll.u32 %s1410, 4
          %s1415 = int_to_ptr.hbm [resolvable:$true] %s1414
          %1417 = dma.vmem_to_hbm [thread:$0]  %s1413, 32, %s1415, %s1400
        $region64: #{tpu_custom_call.1} parent=59 // pred_fallthru
          _
      $region60: #{tpu_custom_call.1} parent=5 // pred_fallthru
        _
      %p1418 = scmp.le.s32.totalorder 2, %s19
      // Predicated region
      $region65: #{tpu_custom_call.1} parent=5 // pred_check
        %p1419 = pneg %p1418
      $region66: #{tpu_custom_call.1} parent=5 // pred_check_branch
        %1421 = sbr.rel (%p1419) target = $region68
      $region67: #{tpu_custom_call.1} parent=5 // pred_region
        %s1422 = ssub.s32 %s19, 2
        // Predicated region
        $region69: #{tpu_custom_call.1} parent=67 // pred_check
          %p1423 = pneg %p268
        $region70: #{tpu_custom_call.1} parent=67 // pred_check_branch
          %1425 = sbr.rel (%p1423) target = $region72
        $region71: #{tpu_custom_call.1} parent=67 // pred_region
          %s1426 = sand.u32 %s253, 1
          %s1427 = scalar_lea.sflag [#allocation3], %s1426
          %s1428 = sand.u32 %s253, 1
          %s1429 = smul.addr %s1428, 2
          %s1430 = scalar_lea.vmem [#allocation2], %s1429
          %1432 = dma.done %s1427, 32
        $region72: #{tpu_custom_call.1} parent=67 // pred_fallthru
          _
      $region68: #{tpu_custom_call.1} parent=5 // pred_fallthru
        _
    $region6: #{tpu_custom_call.1} parent=1 // loop_footer
      %s23 = sadd.s32 1, %s19
    $region7: #{tpu_custom_call.1} parent=1 // loop_footer_branch
      %18 = sbr.rel target = $region3
    $region8: #{tpu_custom_call.1} parent=1 // loop_exit
      _
    %1433 = vsyncpa [#allocation3], 1
    %s1434 = scalar_lea.sflag [#allocation3], 1
    %1435 = vsyncpa %s1434, 1

</llo_original>
